<compile_context>
chip_gen: v7x
topology: tpu7x:2x2x1
jax: 0.10.0
libtpu: 0.0.40
codegen_flags: <defaults>
</compile_context>

<pallas_src>
import math

import jax
import jax.numpy as jnp
from jax.experimental import pallas as pl
from jax.experimental.pallas import tpu as pltpu


# ---------------------------------------------------------------------------
# Pallas kernel:
#   h1 = lrelu(x@W1a + cond@W1b + b1); h2 = lrelu(h1@W2 + b2)
#   out = sigmoid(h2@W3 + b3)
# All matmuls are bf16 x bf16 -> f32 accumulation on the MXU.
# ---------------------------------------------------------------------------
def _disc_kernel(x_ref, c_ref, w1a_ref, w1b_ref, b1_ref,
                 w2_ref, b2_ref, w3_ref, b3_ref, o_ref):
    x = x_ref[...].astype(jnp.bfloat16)          # (TB, 784)  image rows
    c = c_ref[...]                               # (TB, 128)  bf16 cond slab

    h1 = (jnp.dot(x, w1a_ref[...], preferred_element_type=jnp.float32)
          + jnp.dot(c, w1b_ref[...], preferred_element_type=jnp.float32)
          + b1_ref[...])
    h1 = jnp.where(h1 > 0, h1, 0.2 * h1)                       # LeakyReLU(0.2)

    h2 = jnp.dot(h1.astype(jnp.bfloat16), w2_ref[...],
                 preferred_element_type=jnp.float32) + b2_ref[...]
    h2 = jnp.where(h2 > 0, h2, 0.2 * h2)                       # LeakyReLU(0.2)

    h3 = jnp.dot(h2.astype(jnp.bfloat16), w3_ref[...],
                 preferred_element_type=jnp.float32) + b3_ref[...]

    # Numerically stable sigmoid; reciprocal goes to the (otherwise idle) EUP.
    e = jnp.exp(-jnp.abs(h3))
    inv = pl.reciprocal(1.0 + e, approx=True)
    o_ref[...] = jnp.where(h3 >= 0, inv, e * inv)


def _round_up(x, m):
    return ((x + m - 1) // m) * m


# ---------------------------------------------------------------------------
# Parameter construction (deterministic, mirrors PyTorch _initialize_weights)
# ---------------------------------------------------------------------------
def make_params(key, image_size=28, channels=1, num_classes=10):
    d_in = channels * image_size * image_size + num_classes
    dims = [(d_in, 512), (512, 256), (256, 1)]

    keys = jax.random.split(key, 1 + len(dims))
    # nn.Embedding default init: N(0, 1)  (not modified by _initialize_weights)
    emb = jax.random.normal(keys[0], (num_classes, num_classes), jnp.float32)

    params = {"emb": emb}
    for i, (fan_in, fan_out) in enumerate(dims):
        # kaiming_normal_ (fan_in, gain sqrt(2)), then *= 0.1 ; bias = 0
        std = math.sqrt(2.0 / fan_in) * 0.1
        w = jax.random.normal(keys[i + 1], (fan_in, fan_out), jnp.float32) * std
        b = jnp.zeros((fan_out,), jnp.float32)
        params[f"w{i+1}"] = w
        params[f"b{i+1}"] = b
    return params


def prepare_kernel_params(params, *, cond_pad=128):
    """Split/pad weights to TPU tile sizes and cast them to bf16 ONCE."""
    def pad2d(a, r, c):
        return jnp.pad(a, ((0, r - a.shape[0]), (0, c - a.shape[1])))

    emb = params["emb"]
    nc = emb.shape[1]
    w1, w2, w3 = params["w1"], params["w2"], params["w3"]
    d_in, d1 = w1.shape
    d2, d3 = w2.shape[1], w3.shape[1]
    d_flat = d_in - nc                                    # image features (784)

    d1_p = _round_up(d1, 128)
    d2_p = _round_up(d2, 128)
    d3_p = _round_up(d3, 128)

    return {
        "emb": emb,                      # (num_classes, num_classes) f32
        "d_out": d3,
        "d_flat": d_flat,
        "cond_pad": cond_pad,
        # First Linear split into image half + label-embedding half (the
        # embedding half's rows are zero-padded to a full 128-lane cond slab,
        # so padding lanes contribute exactly zero).
        "w1a": pad2d(w1[:d_flat], d_flat, d1_p).astype(jnp.bfloat16),
        "w1b": pad2d(w1[d_flat:], cond_pad, d1_p).astype(jnp.bfloat16),
        "w2": pad2d(w2, d1_p, d2_p).astype(jnp.bfloat16),
        "w3": pad2d(w3, d2_p, d3_p).astype(jnp.bfloat16),
        "b1": pad2d(params["b1"].reshape(1, -1), 1, d1_p),
        "b2": pad2d(params["b2"].reshape(1, -1), 1, d2_p),
        "b3": pad2d(params["b3"].reshape(1, -1), 1, d3_p),
    }


# ---------------------------------------------------------------------------
# Wrapper: embedding lookup in JAX, everything else in the fused Pallas kernel
# ---------------------------------------------------------------------------
def discriminator_forward(kp, inputs, labels, *, batch_tile=1024):
    n = inputs.shape[0]
    flat = inputs.reshape(n, -1).astype(jnp.float32)            # (N, C*H*W)
    d_flat = flat.shape[1]

    nc = kp["emb"].shape[1]
    cond_pad = kp["cond_pad"]
    cond = kp["emb"][labels]                                    # (N, num_classes)
    cond_p = jnp.pad(cond, ((0, 0), (0, cond_pad - nc))).astype(jnp.bfloat16)

    d1_p = kp["w1a"].shape[1]
    d2_p = kp["w2"].shape[1]
    d3_p = kp["w3"].shape[1]

    # Batch tiling. Rows padded to multiples of 16 (bf16 sublane packing of the
    # cond slab). Tiny batches -> one tile; larger batches -> at least two grid
    # steps so v7x's 2 TensorCores can split the "parallel" batch axis; tile
    # capped at batch_tile so double-buffered f32 input tiles stay well inside
    # every generation's VMEM (incl. v5e's small default scoped limit).
    n_al = _round_up(max(n, 16), 16)
    if n_al <= 256:
        tb = n_al
    else:
        tb = min(batch_tile, _round_up((n_al + 1) // 2, 16))
    n_p = _round_up(n_al, tb)

    if n_p != n:
        flat = jnp.pad(flat, ((0, n_p - n), (0, 0)))
        cond_p = jnp.pad(cond_p, ((0, n_p - n), (0, 0)))

    grid = (n_p // tb,)
    const = lambda i: (0, 0)
    single = pl.Buffered(1)     # weights/biases never change -> no double buffer

    out_p = pl.pallas_call(
        _disc_kernel,
        out_shape=jax.ShapeDtypeStruct((n_p, d3_p), jnp.float32),
        grid=grid,
        in_specs=[
            pl.BlockSpec((tb, d_flat), lambda i: (i, 0)),       # image rows (pipelined)
            pl.BlockSpec((tb, cond_pad), lambda i: (i, 0)),     # cond rows (pipelined)
            pl.BlockSpec((d_flat, d1_p), const, pipeline_mode=single),   # w1a
            pl.BlockSpec((cond_pad, d1_p), const, pipeline_mode=single), # w1b
            pl.BlockSpec((1, d1_p), const, pipeline_mode=single),        # b1
            pl.BlockSpec((d1_p, d2_p), const, pipeline_mode=single),     # w2
            pl.BlockSpec((1, d2_p), const, pipeline_mode=single),        # b2
            pl.BlockSpec((d2_p, d3_p), const, pipeline_mode=single),     # w3
            pl.BlockSpec((1, d3_p), const, pipeline_mode=single),        # b3
        ],
        out_specs=pl.BlockSpec((tb, d3_p), lambda i: (i, 0)),   # lane-dense output
        compiler_params=pltpu.CompilerParams(
            dimension_semantics=("parallel",),
            vmem_limit_bytes=32 * 1024 * 1024),
    )(flat, cond_p, kp["w1a"], kp["w1b"], kp["b1"],
      kp["w2"], kp["b2"], kp["w3"], kp["b3"])

    # Strip batch / feature padding -> (N, 1), matching PyTorch output.
    return out_p[:n, : kp["d_out"]]


# ---------------------------------------------------------------------------
def _reference_forward(kp, inputs, labels):
    """Pure-JAX reference with the same bf16-operand / f32-accumulate math."""
    n = inputs.shape[0]
    flat = inputs.reshape(n, -1).astype(jnp.float32)
    nc = kp["emb"].shape[1]
    cond = kp["emb"][labels]
    cond_p = jnp.pad(cond, ((0, 0), (0, kp["cond_pad"] - nc))).astype(jnp.bfloat16)

    h = (jnp.dot(flat.astype(jnp.bfloat16), kp["w1a"],
                 preferred_element_type=jnp.float32)
         + jnp.dot(cond_p, kp["w1b"], preferred_element_type=jnp.float32)
         + kp["b1"])
    h = jnp.where(h > 0, h, 0.2 * h)
    h = jnp.dot(h.astype(jnp.bfloat16), kp["w2"],
                preferred_element_type=jnp.float32) + kp["b2"]
    h = jnp.where(h > 0, h, 0.2 * h)
    h = jnp.dot(h.astype(jnp.bfloat16), kp["w3"],
                preferred_element_type=jnp.float32) + kp["b3"]
    return jax.nn.sigmoid(h)[:, : kp["d_out"]]


if __name__ == "__main__":
    key = jax.random.PRNGKey(0)
    k_param, k_img, k_lbl = jax.random.split(key, 3)

    image_size, channels, num_classes = 28, 1, 10
    batch = 4

    params = make_params(k_param, image_size, channels, num_classes)
    kparams = prepare_kernel_params(params)   # pad + split + bf16 cast, ONCE

    # NCHW images in [-1, 1] (typical GAN input range) and integer labels.
    inputs = jax.random.uniform(
        k_img, (batch, channels, image_size, image_size),
        dtype=jnp.float32, minval=-1.0, maxval=1.0)
    labels = jax.random.randint(k_lbl, (batch,), 0, num_classes)

    out = discriminator_forward(kparams, inputs, labels)
    out = jax.block_until_ready(out)

    ref = _reference_forward(kparams, inputs, labels)
    assert out.shape == (batch, 1), out.shape
    # bf16 matmul operands + approx reciprocal: compare with a modest tolerance.
    assert jnp.allclose(out, ref, atol=2e-3, rtol=2e-3), (out, ref)

    print("KERNEL_OK")
</pallas_src>

<mosaic_0001>
module attributes {stable_mosaic.version = 11 : i64} {
  func.func @_disc_kernel(%arg0: i32, %arg1: memref<16x784xf32, #tpu.memory_space<vmem>>, %arg2: memref<16x128xbf16, #tpu.memory_space<vmem>>, %arg3: memref<784x512xbf16, #tpu.memory_space<vmem>>, %arg4: memref<128x512xbf16, #tpu.memory_space<vmem>>, %arg5: memref<1x512xf32, #tpu.memory_space<vmem>>, %arg6: memref<512x256xbf16, #tpu.memory_space<vmem>>, %arg7: memref<1x256xf32, #tpu.memory_space<vmem>>, %arg8: memref<256x128xbf16, #tpu.memory_space<vmem>>, %arg9: memref<1x128xf32, #tpu.memory_space<vmem>>, %arg10: memref<16x128xf32, #tpu.memory_space<vmem>>) attributes {dimension_semantics = [#tpu.dimension_semantics<parallel>], iteration_bounds = array<i64: 1>, scalar_prefetch = 0 : i64, scratch_operands = 0 : i64, tpu.core_type = #tpu.core_type<tc>, window_params = [{transform_indices = @transform_0, window_bounds = array<i64: 16, 784>}, {transform_indices = @transform_1, window_bounds = array<i64: 16, 128>}, {pipeline_mode = #tpu.pipeline_mode<synchronous>, transform_indices = @transform_2, window_bounds = array<i64: 784, 512>}, {pipeline_mode = #tpu.pipeline_mode<synchronous>, transform_indices = @transform_3, window_bounds = array<i64: 128, 512>}, {pipeline_mode = #tpu.pipeline_mode<synchronous>, transform_indices = @transform_4, window_bounds = array<i64: 1, 512>}, {pipeline_mode = #tpu.pipeline_mode<synchronous>, transform_indices = @transform_5, window_bounds = array<i64: 512, 256>}, {pipeline_mode = #tpu.pipeline_mode<synchronous>, transform_indices = @transform_6, window_bounds = array<i64: 1, 256>}, {pipeline_mode = #tpu.pipeline_mode<synchronous>, transform_indices = @transform_7, window_bounds = array<i64: 256, 128>}, {pipeline_mode = #tpu.pipeline_mode<synchronous>, transform_indices = @transform_8, window_bounds = array<i64: 1, 128>}, {transform_indices = @transform_9, window_bounds = array<i64: 16, 128>}]} {
    %c0 = arith.constant 0 : index
    %c0_0 = arith.constant 0 : index
    %0 = vector.load %arg1[%c0, %c0_0] : memref<16x784xf32, #tpu.memory_space<vmem>>, vector<16x784xf32>
    %1 = arith.truncf %0 : vector<16x784xf32> to vector<16x784xbf16>
    %c0_1 = arith.constant 0 : index
    %c0_2 = arith.constant 0 : index
    %2 = vector.load %arg2[%c0_1, %c0_2] : memref<16x128xbf16, #tpu.memory_space<vmem>>, vector<16x128xbf16>
    %c0_3 = arith.constant 0 : index
    %c0_4 = arith.constant 0 : index
    %3 = vector.load %arg3[%c0_3, %c0_4] : memref<784x512xbf16, #tpu.memory_space<vmem>>, vector<784x512xbf16>
    %cst = arith.constant dense<0.000000e+00> : vector<16x512xf32>
    %4 = tpu.matmul %1, %3, %cst {dimension_numbers = #tpu.dot_dimension_numbers<[1], [0], [0], [1], [0, 0, 1, 1], [], []>} : vector<16x784xbf16>, vector<784x512xbf16>, vector<16x512xf32> -> vector<16x512xf32>
    %c0_5 = arith.constant 0 : index
    %c0_6 = arith.constant 0 : index
    %5 = vector.load %arg4[%c0_5, %c0_6] : memref<128x512xbf16, #tpu.memory_space<vmem>>, vector<128x512xbf16>
    %cst_7 = arith.constant dense<0.000000e+00> : vector<16x512xf32>
    %6 = tpu.matmul %2, %5, %cst_7 {dimension_numbers = #tpu.dot_dimension_numbers<[1], [0], [0], [1], [0, 0, 1, 1], [], []>} : vector<16x128xbf16>, vector<128x512xbf16>, vector<16x512xf32> -> vector<16x512xf32>
    %7 = arith.addf %4, %6 : vector<16x512xf32>
    %c0_8 = arith.constant 0 : index
    %c0_9 = arith.constant 0 : index
    %8 = vector.load %arg5[%c0_8, %c0_9] : memref<1x512xf32, #tpu.memory_space<vmem>>, vector<1x512xf32>
    %9 = vector.broadcast %8 : vector<1x512xf32> to vector<16x512xf32>
    %10 = arith.addf %7, %9 : vector<16x512xf32>
    %cst_10 = arith.constant 0.000000e+00 : f32
    %11 = vector.broadcast %cst_10 : f32 to vector<16x512xf32>
    %12 = arith.cmpf ogt, %10, %11 : vector<16x512xf32>
    %cst_11 = arith.constant 2.000000e-01 : f32
    %13 = vector.broadcast %cst_11 : f32 to vector<16x512xf32>
    %14 = arith.mulf %13, %10 : vector<16x512xf32>
    %15 = arith.select %12, %10, %14 : vector<16x512xi1>, vector<16x512xf32>
    %16 = arith.truncf %15 : vector<16x512xf32> to vector<16x512xbf16>
    %c0_12 = arith.constant 0 : index
    %c0_13 = arith.constant 0 : index
    %17 = vector.load %arg6[%c0_12, %c0_13] : memref<512x256xbf16, #tpu.memory_space<vmem>>, vector<512x256xbf16>
    %cst_14 = arith.constant dense<0.000000e+00> : vector<16x256xf32>
    %18 = tpu.matmul %16, %17, %cst_14 {dimension_numbers = #tpu.dot_dimension_numbers<[1], [0], [0], [1], [0, 0, 1, 1], [], []>} : vector<16x512xbf16>, vector<512x256xbf16>, vector<16x256xf32> -> vector<16x256xf32>
    %c0_15 = arith.constant 0 : index
    %c0_16 = arith.constant 0 : index
    %19 = vector.load %arg7[%c0_15, %c0_16] : memref<1x256xf32, #tpu.memory_space<vmem>>, vector<1x256xf32>
    %20 = vector.broadcast %19 : vector<1x256xf32> to vector<16x256xf32>
    %21 = arith.addf %18, %20 : vector<16x256xf32>
    %cst_17 = arith.constant 0.000000e+00 : f32
    %22 = vector.broadcast %cst_17 : f32 to vector<16x256xf32>
    %23 = arith.cmpf ogt, %21, %22 : vector<16x256xf32>
    %cst_18 = arith.constant 2.000000e-01 : f32
    %24 = vector.broadcast %cst_18 : f32 to vector<16x256xf32>
    %25 = arith.mulf %24, %21 : vector<16x256xf32>
    %26 = arith.select %23, %21, %25 : vector<16x256xi1>, vector<16x256xf32>
    %27 = arith.truncf %26 : vector<16x256xf32> to vector<16x256xbf16>
    %c0_19 = arith.constant 0 : index
    %c0_20 = arith.constant 0 : index
    %28 = vector.load %arg8[%c0_19, %c0_20] : memref<256x128xbf16, #tpu.memory_space<vmem>>, vector<256x128xbf16>
    %cst_21 = arith.constant dense<0.000000e+00> : vector<16x128xf32>
    %29 = tpu.matmul %27, %28, %cst_21 {dimension_numbers = #tpu.dot_dimension_numbers<[1], [0], [0], [1], [0, 0, 1, 1], [], []>} : vector<16x256xbf16>, vector<256x128xbf16>, vector<16x128xf32> -> vector<16x128xf32>
    %c0_22 = arith.constant 0 : index
    %c0_23 = arith.constant 0 : index
    %30 = vector.load %arg9[%c0_22, %c0_23] : memref<1x128xf32, #tpu.memory_space<vmem>>, vector<1x128xf32>
    %31 = vector.broadcast %30 : vector<1x128xf32> to vector<16x128xf32>
    %32 = arith.addf %29, %31 : vector<16x128xf32>
    %33 = math.absf %32 : vector<16x128xf32>
    %cst_24 = arith.constant 0.000000e+00 : f32
    %34 = vector.broadcast %cst_24 : f32 to vector<16x128xf32>
    %35 = arith.subf %34, %33 : vector<16x128xf32>
    %36 = math.exp %35 : vector<16x128xf32>
    %cst_25 = arith.constant 1.000000e+00 : f32
    %37 = vector.broadcast %cst_25 : f32 to vector<16x128xf32>
    %38 = arith.addf %37, %36 : vector<16x128xf32>
    %39 = tpu.reciprocal %38 {approx = true} : vector<16x128xf32> -> vector<16x128xf32>
    %cst_26 = arith.constant 0.000000e+00 : f32
    %40 = vector.broadcast %cst_26 : f32 to vector<16x128xf32>
    %41 = arith.cmpf oge, %32, %40 : vector<16x128xf32>
    %42 = arith.mulf %36, %39 : vector<16x128xf32>
    %43 = arith.select %41, %39, %42 : vector<16x128xi1>, vector<16x128xf32>
    %c0_27 = arith.constant 0 : index
    %c0_28 = arith.constant 0 : index
    %44 = vector.load %arg10[%c0_27, %c0_28] : memref<16x128xf32, #tpu.memory_space<vmem>>, vector<16x128xf32>
    tpu.vector_store %arg10[%c0_27, %c0_28], %43 {strides = array<i32>} : memref<16x128xf32, #tpu.memory_space<vmem>>, vector<16x128xf32>,
    return
  }
  func.func @transform_0(%arg0: i32) -> (i32, i32) {
    %c0_i32 = arith.constant 0 : i32
    %c0_i32_0 = arith.constant 0 : i32
    return %arg0, %c0_i32 : i32, i32
  }
  func.func @transform_1(%arg0: i32) -> (i32, i32) {
    %c0_i32 = arith.constant 0 : i32
    %c0_i32_0 = arith.constant 0 : i32
    return %arg0, %c0_i32 : i32, i32
  }
  func.func @transform_2(%arg0: i32) -> (i32, i32) {
    %c0_i32 = arith.constant 0 : i32
    %c0_i32_0 = arith.constant 0 : i32
    %c0_i32_1 = arith.constant 0 : i32
    return %c0_i32, %c0_i32_0 : i32, i32
  }
  func.func @transform_3(%arg0: i32) -> (i32, i32) {
    %c0_i32 = arith.constant 0 : i32
    %c0_i32_0 = arith.constant 0 : i32
    %c0_i32_1 = arith.constant 0 : i32
    return %c0_i32, %c0_i32_0 : i32, i32
  }
  func.func @transform_4(%arg0: i32) -> (i32, i32) {
    %c0_i32 = arith.constant 0 : i32
    %c0_i32_0 = arith.constant 0 : i32
    %c0_i32_1 = arith.constant 0 : i32
    return %c0_i32, %c0_i32_0 : i32, i32
  }
  func.func @transform_5(%arg0: i32) -> (i32, i32) {
    %c0_i32 = arith.constant 0 : i32
    %c0_i32_0 = arith.constant 0 : i32
    %c0_i32_1 = arith.constant 0 : i32
    return %c0_i32, %c0_i32_0 : i32, i32
  }
  func.func @transform_6(%arg0: i32) -> (i32, i32) {
    %c0_i32 = arith.constant 0 : i32
    %c0_i32_0 = arith.constant 0 : i32
    %c0_i32_1 = arith.constant 0 : i32
    return %c0_i32, %c0_i32_0 : i32, i32
  }
  func.func @transform_7(%arg0: i32) -> (i32, i32) {
    %c0_i32 = arith.constant 0 : i32
    %c0_i32_0 = arith.constant 0 : i32
    %c0_i32_1 = arith.constant 0 : i32
    return %c0_i32, %c0_i32_0 : i32, i32
  }
  func.func @transform_8(%arg0: i32) -> (i32, i32) {
    %c0_i32 = arith.constant 0 : i32
    %c0_i32_0 = arith.constant 0 : i32
    %c0_i32_1 = arith.constant 0 : i32
    return %c0_i32, %c0_i32_0 : i32, i32
  }
  func.func @transform_9(%arg0: i32) -> (i32, i32) {
    %c0_i32 = arith.constant 0 : i32
    %c0_i32_0 = arith.constant 0 : i32
    return %arg0, %c0_i32 : i32, i32
  }
}

</mosaic_0001>

<llo_original>
// kernel: tpu_custom_call.1
$region0: #{tpu_custom_call.1}
  #allocation0 [shape = 'u32[]', space=smem, size = 0x4, offset = 0x4, fixed_abs, tag = 'smem constant byte address 0x4 - core index']
  #allocation1 [shape = 'u32[144,128]{1,0:T(1,128)}', space=vmem, size = 0x12000, scoped, tag = 'internal scratch']
  %s0 = inlined_call_operand.hbm [shape: f32[16,784], index: 0, kind: input, shape index: {}]
  %s1 = inlined_call_operand.hbm [shape: bf16[16,128], index: 1, kind: input, shape index: {}]
  %s2 = inlined_call_operand.hbm [shape: bf16[784,512], index: 2, kind: input, shape index: {}]
  %s3 = inlined_call_operand.hbm [shape: bf16[128,512], index: 3, kind: input, shape index: {}]
  %s4 = inlined_call_operand.vmem [shape: f32[1,512], index: 4, kind: input, shape index: {}]
  %s5 = inlined_call_operand.hbm [shape: bf16[512,256], index: 5, kind: input, shape index: {}]
  %s6 = inlined_call_operand.vmem [shape: f32[1,256], index: 6, kind: input, shape index: {}]
  %s7 = inlined_call_operand.hbm [shape: bf16[256,128], index: 7, kind: input, shape index: {}]
  %s8 = inlined_call_operand.vmem [shape: f32[1,128], index: 8, kind: input, shape index: {}]
  %s9 = inlined_call_operand.hbm [shape: f32[16,128], index: 9, kind: output, shape index: {}]
  %s10 = sld [smem:[#allocation0]]
  $region70: #{tpu_custom_call.1} parent=0
    _
  %s12 = ssub.s32 1, %s10
  %s13 = scalar_select 0, %s12, %s10
  $region1: #{tpu_custom_call.1} parent=0
    #allocation2 [shape = 'u8[57344]{0}', space=vmem, size = 0xe000, scoped, tag = 'input window, operand 0, single buffered']
    #allocation3 [shape = 's32[1]{0}', space=sflag, size = 0x4, scoped, tag = 'scoped memory for tpu_custom_call.1']
    #allocation4 [shape = 's32[1]{0}', space=sflag, size = 0x4, scoped, tag = 'scoped memory for tpu_custom_call.1']
    #allocation5 [shape = 'u8[4096]{0}', space=vmem, size = 0x1000, scoped, tag = 'input window, operand 1, single buffered']
    #allocation6 [shape = 's32[1]{0}', space=sflag, size = 0x4, scoped, tag = 'scoped memory for tpu_custom_call.1']
    #allocation7 [shape = 'u8[802816]{0}', space=vmem, size = 0xc4000, scoped, tag = 'input window, operand 2, single buffered']
    #allocation8 [shape = 'u8[131072]{0}', space=vmem, size = 0x20000, scoped, tag = 'input window, operand 3, single buffered']
    #allocation9 [shape = 's32[1]{0}', space=sflag, size = 0x4, scoped, tag = 'scoped memory for tpu_custom_call.1']
    #allocation10 [shape = 'u8[262144]{0}', space=vmem, size = 0x40000, scoped, tag = 'input window, operand 5, single buffered']
    #allocation11 [shape = 'u8[65536]{0}', space=vmem, size = 0x10000, scoped, tag = 'input window, operand 7, single buffered']
    #allocation12 [shape = 's32[1]{0}', space=sflag, size = 0x4, scoped, tag = 'scoped memory for tpu_custom_call.1']
    #allocation13 [shape = 'u8[8192]{0}', space=vmem, size = 0x2000, scoped, tag = 'output window, operand 0, single buffered']
    %14 = vsyncpa [#allocation3], 0
    %15 = vsyncpa [#allocation6], 0
    %16 = vsyncpa [#allocation9], 0
    %17 = vsyncpa [#allocation12], 0
    %18 = vsyncpa [#allocation4], 0
    // Predicated region
    $region2: #{tpu_custom_call.1} parent=1 // pred_check
      _
    $region3: #{tpu_custom_call.1} parent=1 // pred_check_branch
      %20 = sbr.rel (0) target = $region5
    $region4: #{tpu_custom_call.1} parent=1 // pred_region
      %s22 = ssub.s32 1792, 1792
      %23 = vsyncadd [#allocation3], %s22
      %s24 = sshll.u32 [#allocation2], 4
      %s25 = int_to_ptr.vmem [resolvable:$true] %s24
      %30 = dma.hbm_to_vmem [thread:$0]  %s0, 1792, %s25, [#allocation3], 896, 896, 56
    $region5: #{tpu_custom_call.1} parent=1 // pred_fallthru
      _
    // Predicated region
    $region6: #{tpu_custom_call.1} parent=1 // pred_check
      _
    $region7: #{tpu_custom_call.1} parent=1 // pred_check_branch
      %32 = sbr.rel (0) target = $region9
    $region8: #{tpu_custom_call.1} parent=1 // pred_region
      %s34 = ssub.s32 128, 128
      %35 = vsyncadd [#allocation6], %s34
      %s36 = sshll.u32 [#allocation5], 4
      %s37 = int_to_ptr.vmem [resolvable:$true] %s36
      %42 = dma.hbm_to_vmem [thread:$0]  %s1, 128, %s37, [#allocation6], 64, 64, 4
    $region9: #{tpu_custom_call.1} parent=1 // pred_fallthru
      _
    // Predicated region
    $region10: #{tpu_custom_call.1} parent=1 // pred_check
      _
    $region11: #{tpu_custom_call.1} parent=1 // pred_check_branch
      %44 = sbr.rel (0) target = $region13
    $region12: #{tpu_custom_call.1} parent=1 // pred_region
      %s46 = ssub.s32 25088, 25088
      %47 = vsyncadd [#allocation6], %s46
      %s48 = sshll.u32 [#allocation7], 4
      %s49 = int_to_ptr.vmem [resolvable:$true] %s48
      %54 = dma.hbm_to_vmem [thread:$0]  %s2, 25088, %s49, [#allocation6], 256, 256, 16
    $region13: #{tpu_custom_call.1} parent=1 // pred_fallthru
      _
    // Predicated region
    $region14: #{tpu_custom_call.1} parent=1 // pred_check
      _
    $region15: #{tpu_custom_call.1} parent=1 // pred_check_branch
      %56 = sbr.rel (0) target = $region17
    $region16: #{tpu_custom_call.1} parent=1 // pred_region
      %s58 = ssub.s32 4096, 4096
      %59 = vsyncadd [#allocation9], %s58
      %s60 = sshll.u32 [#allocation8], 4
      %s61 = int_to_ptr.vmem [resolvable:$true] %s60
      %66 = dma.hbm_to_vmem [thread:$0]  %s3, 4096, %s61, [#allocation9], 256, 256, 16
    $region17: #{tpu_custom_call.1} parent=1 // pred_fallthru
      _
    // Predicated region
    $region18: #{tpu_custom_call.1} parent=1 // pred_check
      _
    $region19: #{tpu_custom_call.1} parent=1 // pred_check_branch
      %68 = sbr.rel (0) target = $region21
    $region20: #{tpu_custom_call.1} parent=1 // pred_region
      _
    $region21: #{tpu_custom_call.1} parent=1 // pred_fallthru
      _
    // Predicated region
    $region22: #{tpu_custom_call.1} parent=1 // pred_check
      _
    $region23: #{tpu_custom_call.1} parent=1 // pred_check_branch
      %70 = sbr.rel (0) target = $region25
    $region24: #{tpu_custom_call.1} parent=1 // pred_region
      %s72 = ssub.s32 8192, 8192
      %73 = vsyncadd [#allocation9], %s72
      %s74 = sshll.u32 [#allocation10], 4
      %s75 = int_to_ptr.vmem [resolvable:$true] %s74
      %80 = dma.hbm_to_vmem [thread:$0]  %s5, 8192, %s75, [#allocation9], 128, 128, 8
    $region25: #{tpu_custom_call.1} parent=1 // pred_fallthru
      _
    // Predicated region
    $region26: #{tpu_custom_call.1} parent=1 // pred_check
      _
    $region27: #{tpu_custom_call.1} parent=1 // pred_check_branch
      %82 = sbr.rel (0) target = $region29
    $region28: #{tpu_custom_call.1} parent=1 // pred_region
      _
    $region29: #{tpu_custom_call.1} parent=1 // pred_fallthru
      _
    // Predicated region
    $region30: #{tpu_custom_call.1} parent=1 // pred_check
      _
    $region31: #{tpu_custom_call.1} parent=1 // pred_check_branch
      %84 = sbr.rel (0) target = $region33
    $region32: #{tpu_custom_call.1} parent=1 // pred_region
      %s86 = ssub.s32 2048, 2048
      %87 = vsyncadd [#allocation12], %s86
      %s88 = sshll.u32 [#allocation11], 4
      %s89 = int_to_ptr.vmem [resolvable:$true] %s88
      %94 = dma.hbm_to_vmem [thread:$0]  %s7, 2048, %s89, [#allocation12], 64, 64, 4
    $region33: #{tpu_custom_call.1} parent=1 // pred_fallthru
      _
    // Predicated region
    $region34: #{tpu_custom_call.1} parent=1 // pred_check
      _
    $region35: #{tpu_custom_call.1} parent=1 // pred_check_branch
      %96 = sbr.rel (0) target = $region37
    $region36: #{tpu_custom_call.1} parent=1 // pred_region
      _
    $region37: #{tpu_custom_call.1} parent=1 // pred_fallthru
      _
    // Predicated region
    $region38: #{tpu_custom_call.1} parent=1 // pred_check
      _
    $region39: #{tpu_custom_call.1} parent=1 // pred_check_branch
      %98 = sbr.rel (0) target = $region41
    $region40: #{tpu_custom_call.1} parent=1 // pred_region
      %99 = dma.done [#allocation3], 1792
    $region41: #{tpu_custom_call.1} parent=1 // pred_fallthru
      _
    // Predicated region
    $region42: #{tpu_custom_call.1} parent=1 // pred_check
      _
    $region43: #{tpu_custom_call.1} parent=1 // pred_check_branch
      %101 = sbr.rel (0) target = $region45
    $region44: #{tpu_custom_call.1} parent=1 // pred_region
      %102 = dma.done [#allocation6], 128
    $region45: #{tpu_custom_call.1} parent=1 // pred_fallthru
      _
    // Predicated region
    $region46: #{tpu_custom_call.1} parent=1 // pred_check
      _
    $region47: #{tpu_custom_call.1} parent=1 // pred_check_branch
      %104 = sbr.rel (0) target = $region49
    $region48: #{tpu_custom_call.1} parent=1 // pred_region
      %105 = dma.done [#allocation6], 25088
    $region49: #{tpu_custom_call.1} parent=1 // pred_fallthru
      _
    // Predicated region
    $region50: #{tpu_custom_call.1} parent=1 // pred_check
      _
    $region51: #{tpu_custom_call.1} parent=1 // pred_check_branch
      %107 = sbr.rel (0) target = $region53
    $region52: #{tpu_custom_call.1} parent=1 // pred_region
      %108 = dma.done [#allocation9], 4096
    $region53: #{tpu_custom_call.1} parent=1 // pred_fallthru
      _
    // Predicated region
    $region54: #{tpu_custom_call.1} parent=1 // pred_check
      _
    $region55: #{tpu_custom_call.1} parent=1 // pred_check_branch
      %110 = sbr.rel (0) target = $region57
    $region56: #{tpu_custom_call.1} parent=1 // pred_region
      %111 = dma.done [#allocation9], 8192
    $region57: #{tpu_custom_call.1} parent=1 // pred_fallthru
      _
    // Predicated region
    $region58: #{tpu_custom_call.1} parent=1 // pred_check
      _
    $region59: #{tpu_custom_call.1} parent=1 // pred_check_branch
      %113 = sbr.rel (0) target = $region61
    $region60: #{tpu_custom_call.1} parent=1 // pred_region
      %114 = dma.done [#allocation12], 2048
    $region61: #{tpu_custom_call.1} parent=1 // pred_fallthru
      _
    %v116 = vld [vmem:[#allocation2] sm:$0xff]
    %v117 = vld [vmem:[#allocation2 + $0x8] sm:$0xff]
    %v118 = vld [vmem:[#allocation2 + $0x10] sm:$0xff]
    %v119 = vld [vmem:[#allocation2 + $0x18] sm:$0xff]
    %v120 = vld [vmem:[#allocation2 + $0x20] sm:$0xff]
    %v121 = vld [vmem:[#allocation2 + $0x28] sm:$0xff]
    %v122 = vld [vmem:[#allocation2 + $0x30] sm:$0xff]
    %v123 = vld [vmem:[#allocation2 + $0x38] sm:$0xff]
    %v124 = vld [vmem:[#allocation2 + $0x40] sm:$0xff]
    %v125 = vld [vmem:[#allocation2 + $0x48] sm:$0xff]
    %v126 = vld [vmem:[#allocation2 + $0x50] sm:$0xff]
    %v127 = vld [vmem:[#allocation2 + $0x58] sm:$0xff]
    %v128 = vld [vmem:[#allocation2 + $0x60] sm:$0xff]
    %v129 = vld [vmem:[#allocation2 + $0x68] sm:$0xff]
    %v130 = vpack.c.bf16 %v123, %v116
    %v131 = vpack.c.bf16 %v124, %v117
    %v132 = vpack.c.bf16 %v125, %v118
    %v133 = vpack.c.bf16 %v126, %v119
    %v134 = vpack.c.bf16 %v127, %v120
    %v135 = vpack.c.bf16 %v128, %v121
    %v136 = vpack.c.bf16 %v129, %v122
    %v137 = vld [vmem:[#allocation5] sm:$0xf]
    %v138 = vld [vmem:[#allocation5 + $0x4] sm:$0xf]
    %v139 = vld [vmem:[#allocation7] sm:$0xff]
    %v140 = vld [vmem:[#allocation7 + $0x8] sm:$0xff]
    %v141 = vld [vmem:[#allocation7 + $0x10] sm:$0xff]
    %v142 = vld [vmem:[#allocation7 + $0x18] sm:$0xff]
    %v143 = vld [vmem:[#allocation7 + $0x20] sm:$0xff]
    %v144 = vld [vmem:[#allocation7 + $0x28] sm:$0xff]
    %v145 = vld [vmem:[#allocation7 + $0x30] sm:$0xff]
    %v146 = vld [vmem:[#allocation7 + $0x38] sm:$0xff]
    %v147 = vld [vmem:[#allocation7 + $0x40] sm:$0xff]
    %v148 = vld [vmem:[#allocation7 + $0x48] sm:$0xff]
    %v149 = vld [vmem:[#allocation7 + $0x50] sm:$0xff]
    %v150 = vld [vmem:[#allocation7 + $0x58] sm:$0xff]
    %v151 = vld [vmem:[#allocation7 + $0x60] sm:$0xff]
    %v152 = vld [vmem:[#allocation7 + $0x68] sm:$0xff]
    %v153 = vld [vmem:[#allocation7 + $0x70] sm:$0xff]
    %v154 = vld [vmem:[#allocation7 + $0x78] sm:$0xff]
    %v155 = vld [vmem:[#allocation7 + $0x80] sm:$0xff]
    %v156 = vld [vmem:[#allocation7 + $0x88] sm:$0xff]
    %v157 = vld [vmem:[#allocation7 + $0x90] sm:$0xff]
    %v158 = vld [vmem:[#allocation7 + $0x98] sm:$0xff]
    %v159 = vld [vmem:[#allocation7 + $0xa0] sm:$0xff]
    %v160 = vld [vmem:[#allocation7 + $0xa8] sm:$0xff]
    %v161 = vld [vmem:[#allocation7 + $0xb0] sm:$0xff]
    %v162 = vld [vmem:[#allocation7 + $0xb8] sm:$0xff]
    %v163 = vld [vmem:[#allocation7 + $0xc0] sm:$0xff]
    %v164 = vld [vmem:[#allocation7 + $0xc8] sm:$0xff]
    %v165 = vld [vmem:[#allocation7 + $0xd0] sm:$0xff]
    %v166 = vld [vmem:[#allocation7 + $0xd8] sm:$0xff]
    %v167 = vld [vmem:[#allocation7 + $0xe0] sm:$0xff]
    %v168 = vld [vmem:[#allocation7 + $0xe8] sm:$0xff]
    %v169 = vld [vmem:[#allocation7 + $0xf0] sm:$0xff]
    %v170 = vld [vmem:[#allocation7 + $0xf8] sm:$0xff]
    %v171 = vld [vmem:[#allocation7 + $0x100] sm:$0xff]
    %v172 = vld [vmem:[#allocation7 + $0x108] sm:$0xff]
    %v173 = vld [vmem:[#allocation7 + $0x110] sm:$0xff]
    %v174 = vld [vmem:[#allocation7 + $0x118] sm:$0xff]
    %v175 = vld [vmem:[#allocation7 + $0x120] sm:$0xff]
    %v176 = vld [vmem:[#allocation7 + $0x128] sm:$0xff]
    %v177 = vld [vmem:[#allocation7 + $0x130] sm:$0xff]
    %v178 = vld [vmem:[#allocation7 + $0x138] sm:$0xff]
    %v179 = vld [vmem:[#allocation7 + $0x140] sm:$0xff]
    %v180 = vld [vmem:[#allocation7 + $0x148] sm:$0xff]
    %v181 = vld [vmem:[#allocation7 + $0x150] sm:$0xff]
    %v182 = vld [vmem:[#allocation7 + $0x158] sm:$0xff]
    %v183 = vld [vmem:[#allocation7 + $0x160] sm:$0xff]
    %v184 = vld [vmem:[#allocation7 + $0x168] sm:$0xff]
    %v185 = vld [vmem:[#allocation7 + $0x170] sm:$0xff]
    %v186 = vld [vmem:[#allocation7 + $0x178] sm:$0xff]
    %v187 = vld [vmem:[#allocation7 + $0x180] sm:$0xff]
    %v188 = vld [vmem:[#allocation7 + $0x188] sm:$0xff]
    %v189 = vld [vmem:[#allocation7 + $0x190] sm:$0xff]
    %v190 = vld [vmem:[#allocation7 + $0x198] sm:$0xff]
    %v191 = vld [vmem:[#allocation7 + $0x1a0] sm:$0xff]
    %v192 = vld [vmem:[#allocation7 + $0x1a8] sm:$0xff]
    %v193 = vld [vmem:[#allocation7 + $0x1b0] sm:$0xff]
    %v194 = vld [vmem:[#allocation7 + $0x1b8] sm:$0xff]
    %v195 = vld [vmem:[#allocation7 + $0x1c0] sm:$0xff]
    %v196 = vld [vmem:[#allocation7 + $0x1c8] sm:$0xff]
    %v197 = vld [vmem:[#allocation7 + $0x1d0] sm:$0xff]
    %v198 = vld [vmem:[#allocation7 + $0x1d8] sm:$0xff]
    %v199 = vld [vmem:[#allocation7 + $0x1e0] sm:$0xff]
    %v200 = vld [vmem:[#allocation7 + $0x1e8] sm:$0xff]
    %v201 = vld [vmem:[#allocation7 + $0x1f0] sm:$0xff]
    %v202 = vld [vmem:[#allocation7 + $0x1f8] sm:$0xff]
    %v203 = vld [vmem:[#allocation7 + $0x200] sm:$0xff]
    %v204 = vld [vmem:[#allocation7 + $0x208] sm:$0xff]
    %v205 = vld [vmem:[#allocation7 + $0x210] sm:$0xff]
    %v206 = vld [vmem:[#allocation7 + $0x218] sm:$0xff]
    %v207 = vld [vmem:[#allocation7 + $0x220] sm:$0xff]
    %v208 = vld [vmem:[#allocation7 + $0x228] sm:$0xff]
    %v209 = vld [vmem:[#allocation7 + $0x230] sm:$0xff]
    %v210 = vld [vmem:[#allocation7 + $0x238] sm:$0xff]
    %v211 = vld [vmem:[#allocation7 + $0x240] sm:$0xff]
    %v212 = vld [vmem:[#allocation7 + $0x248] sm:$0xff]
    %v213 = vld [vmem:[#allocation7 + $0x250] sm:$0xff]
    %v214 = vld [vmem:[#allocation7 + $0x258] sm:$0xff]
    %v215 = vld [vmem:[#allocation7 + $0x260] sm:$0xff]
    %v216 = vld [vmem:[#allocation7 + $0x268] sm:$0xff]
    %v217 = vld [vmem:[#allocation7 + $0x270] sm:$0xff]
    %v218 = vld [vmem:[#allocation7 + $0x278] sm:$0xff]
    %v219 = vld [vmem:[#allocation7 + $0x280] sm:$0xff]
    %v220 = vld [vmem:[#allocation7 + $0x288] sm:$0xff]
    %v221 = vld [vmem:[#allocation7 + $0x290] sm:$0xff]
    %v222 = vld [vmem:[#allocation7 + $0x298] sm:$0xff]
    %v223 = vld [vmem:[#allocation7 + $0x2a0] sm:$0xff]
    %v224 = vld [vmem:[#allocation7 + $0x2a8] sm:$0xff]
    %v225 = vld [vmem:[#allocation7 + $0x2b0] sm:$0xff]
    %v226 = vld [vmem:[#allocation7 + $0x2b8] sm:$0xff]
    %v227 = vld [vmem:[#allocation7 + $0x2c0] sm:$0xff]
    %v228 = vld [vmem:[#allocation7 + $0x2c8] sm:$0xff]
    %v229 = vld [vmem:[#allocation7 + $0x2d0] sm:$0xff]
    %v230 = vld [vmem:[#allocation7 + $0x2d8] sm:$0xff]
    %v231 = vld [vmem:[#allocation7 + $0x2e0] sm:$0xff]
    %v232 = vld [vmem:[#allocation7 + $0x2e8] sm:$0xff]
    %v233 = vld [vmem:[#allocation7 + $0x2f0] sm:$0xff]
    %v234 = vld [vmem:[#allocation7 + $0x2f8] sm:$0xff]
    %v235 = vld [vmem:[#allocation7 + $0x300] sm:$0xff]
    %v236 = vld [vmem:[#allocation7 + $0x308] sm:$0xff]
    %v237 = vld [vmem:[#allocation7 + $0x310] sm:$0xff]
    %v238 = vld [vmem:[#allocation7 + $0x318] sm:$0xff]
    %v239 = vld [vmem:[#allocation7 + $0x320] sm:$0xff]
    %v240 = vld [vmem:[#allocation7 + $0x328] sm:$0xff]
    %v241 = vld [vmem:[#allocation7 + $0x330] sm:$0xff]
    %v242 = vld [vmem:[#allocation7 + $0x338] sm:$0xff]
    %v243 = vld [vmem:[#allocation7 + $0x340] sm:$0xff]
    %v244 = vld [vmem:[#allocation7 + $0x348] sm:$0xff]
    %v245 = vld [vmem:[#allocation7 + $0x350] sm:$0xff]
    %v246 = vld [vmem:[#allocation7 + $0x358] sm:$0xff]
    %v247 = vld [vmem:[#allocation7 + $0x360] sm:$0xff]
    %v248 = vld [vmem:[#allocation7 + $0x368] sm:$0xff]
    %v249 = vld [vmem:[#allocation7 + $0x370] sm:$0xff]
    %v250 = vld [vmem:[#allocation7 + $0x378] sm:$0xff]
    %v251 = vld [vmem:[#allocation7 + $0x380] sm:$0xff]
    %v252 = vld [vmem:[#allocation7 + $0x388] sm:$0xff]
    %v253 = vld [vmem:[#allocation7 + $0x390] sm:$0xff]
    %v254 = vld [vmem:[#allocation7 + $0x398] sm:$0xff]
    %v255 = vld [vmem:[#allocation7 + $0x3a0] sm:$0xff]
    %v256 = vld [vmem:[#allocation7 + $0x3a8] sm:$0xff]
    %v257 = vld [vmem:[#allocation7 + $0x3b0] sm:$0xff]
    %v258 = vld [vmem:[#allocation7 + $0x3b8] sm:$0xff]
    %v259 = vld [vmem:[#allocation7 + $0x3c0] sm:$0xff]
    %v260 = vld [vmem:[#allocation7 + $0x3c8] sm:$0xff]
    %v261 = vld [vmem:[#allocation7 + $0x3d0] sm:$0xff]
    %v262 = vld [vmem:[#allocation7 + $0x3d8] sm:$0xff]
    %v263 = vld [vmem:[#allocation7 + $0x3e0] sm:$0xff]
    %v264 = vld [vmem:[#allocation7 + $0x3e8] sm:$0xff]
    %v265 = vld [vmem:[#allocation7 + $0x3f0] sm:$0xff]
    %v266 = vld [vmem:[#allocation7 + $0x3f8] sm:$0xff]
    %v267 = vld [vmem:[#allocation7 + $0x400] sm:$0xff]
    %v268 = vld [vmem:[#allocation7 + $0x408] sm:$0xff]
    %v269 = vld [vmem:[#allocation7 + $0x410] sm:$0xff]
    %v270 = vld [vmem:[#allocation7 + $0x418] sm:$0xff]
    %v271 = vld [vmem:[#allocation7 + $0x420] sm:$0xff]
    %v272 = vld [vmem:[#allocation7 + $0x428] sm:$0xff]
    %v273 = vld [vmem:[#allocation7 + $0x430] sm:$0xff]
    %v274 = vld [vmem:[#allocation7 + $0x438] sm:$0xff]
    %v275 = vld [vmem:[#allocation7 + $0x440] sm:$0xff]
    %v276 = vld [vmem:[#allocation7 + $0x448] sm:$0xff]
    %v277 = vld [vmem:[#allocation7 + $0x450] sm:$0xff]
    %v278 = vld [vmem:[#allocation7 + $0x458] sm:$0xff]
    %v279 = vld [vmem:[#allocation7 + $0x460] sm:$0xff]
    %v280 = vld [vmem:[#allocation7 + $0x468] sm:$0xff]
    %v281 = vld [vmem:[#allocation7 + $0x470] sm:$0xff]
    %v282 = vld [vmem:[#allocation7 + $0x478] sm:$0xff]
    %v283 = vld [vmem:[#allocation7 + $0x480] sm:$0xff]
    %v284 = vld [vmem:[#allocation7 + $0x488] sm:$0xff]
    %v285 = vld [vmem:[#allocation7 + $0x490] sm:$0xff]
    %v286 = vld [vmem:[#allocation7 + $0x498] sm:$0xff]
    %v287 = vld [vmem:[#allocation7 + $0x4a0] sm:$0xff]
    %v288 = vld [vmem:[#allocation7 + $0x4a8] sm:$0xff]
    %v289 = vld [vmem:[#allocation7 + $0x4b0] sm:$0xff]
    %v290 = vld [vmem:[#allocation7 + $0x4b8] sm:$0xff]
    %v291 = vld [vmem:[#allocation7 + $0x4c0] sm:$0xff]
    %v292 = vld [vmem:[#allocation7 + $0x4c8] sm:$0xff]
    %v293 = vld [vmem:[#allocation7 + $0x4d0] sm:$0xff]
    %v294 = vld [vmem:[#allocation7 + $0x4d8] sm:$0xff]
    %v295 = vld [vmem:[#allocation7 + $0x4e0] sm:$0xff]
    %v296 = vld [vmem:[#allocation7 + $0x4e8] sm:$0xff]
    %v297 = vld [vmem:[#allocation7 + $0x4f0] sm:$0xff]
    %v298 = vld [vmem:[#allocation7 + $0x4f8] sm:$0xff]
    %v299 = vld [vmem:[#allocation7 + $0x500] sm:$0xff]
    %v300 = vld [vmem:[#allocation7 + $0x508] sm:$0xff]
    %v301 = vld [vmem:[#allocation7 + $0x510] sm:$0xff]
    %v302 = vld [vmem:[#allocation7 + $0x518] sm:$0xff]
    %v303 = vld [vmem:[#allocation7 + $0x520] sm:$0xff]
    %v304 = vld [vmem:[#allocation7 + $0x528] sm:$0xff]
    %v305 = vld [vmem:[#allocation7 + $0x530] sm:$0xff]
    %v306 = vld [vmem:[#allocation7 + $0x538] sm:$0xff]
    %v307 = vld [vmem:[#allocation7 + $0x540] sm:$0xff]
    %v308 = vld [vmem:[#allocation7 + $0x548] sm:$0xff]
    %v309 = vld [vmem:[#allocation7 + $0x550] sm:$0xff]
    %v310 = vld [vmem:[#allocation7 + $0x558] sm:$0xff]
    %v311 = vld [vmem:[#allocation7 + $0x560] sm:$0xff]
    %v312 = vld [vmem:[#allocation7 + $0x568] sm:$0xff]
    %v313 = vld [vmem:[#allocation7 + $0x570] sm:$0xff]
    %v314 = vld [vmem:[#allocation7 + $0x578] sm:$0xff]
    %v315 = vld [vmem:[#allocation7 + $0x580] sm:$0xff]
    %v316 = vld [vmem:[#allocation7 + $0x588] sm:$0xff]
    %v317 = vld [vmem:[#allocation7 + $0x590] sm:$0xff]
    %v318 = vld [vmem:[#allocation7 + $0x598] sm:$0xff]
    %v319 = vld [vmem:[#allocation7 + $0x5a0] sm:$0xff]
    %v320 = vld [vmem:[#allocation7 + $0x5a8] sm:$0xff]
    %v321 = vld [vmem:[#allocation7 + $0x5b0] sm:$0xff]
    %v322 = vld [vmem:[#allocation7 + $0x5b8] sm:$0xff]
    %v323 = vld [vmem:[#allocation7 + $0x5c0] sm:$0xff]
    %v324 = vld [vmem:[#allocation7 + $0x5c8] sm:$0xff]
    %v325 = vld [vmem:[#allocation7 + $0x5d0] sm:$0xff]
    %v326 = vld [vmem:[#allocation7 + $0x5d8] sm:$0xff]
    %v327 = vld [vmem:[#allocation7 + $0x5e0] sm:$0xff]
    %v328 = vld [vmem:[#allocation7 + $0x5e8] sm:$0xff]
    %v329 = vld [vmem:[#allocation7 + $0x5f0] sm:$0xff]
    %v330 = vld [vmem:[#allocation7 + $0x5f8] sm:$0xff]
    %v331 = vld [vmem:[#allocation7 + $0x600] sm:$0xff]
    %v332 = vld [vmem:[#allocation7 + $0x608] sm:$0xff]
    %v333 = vld [vmem:[#allocation7 + $0x610] sm:$0xff]
    %v334 = vld [vmem:[#allocation7 + $0x618] sm:$0xff]
    %v335 = vld [vmem:[#allocation8] sm:$0xff]
    %v336 = vld [vmem:[#allocation8 + $0x8] sm:$0xff]
    %v337 = vld [vmem:[#allocation8 + $0x10] sm:$0xff]
    %v338 = vld [vmem:[#allocation8 + $0x18] sm:$0xff]
    %v339 = vld [vmem:[#allocation8 + $0x20] sm:$0xff]
    %v340 = vld [vmem:[#allocation8 + $0x28] sm:$0xff]
    %v341 = vld [vmem:[#allocation8 + $0x30] sm:$0xff]
    %v342 = vld [vmem:[#allocation8 + $0x38] sm:$0xff]
    %v343 = vld [vmem:[#allocation8 + $0x40] sm:$0xff]
    %v344 = vld [vmem:[#allocation8 + $0x48] sm:$0xff]
    %v345 = vld [vmem:[#allocation8 + $0x50] sm:$0xff]
    %v346 = vld [vmem:[#allocation8 + $0x58] sm:$0xff]
    %v347 = vld [vmem:[#allocation8 + $0x60] sm:$0xff]
    %v348 = vld [vmem:[#allocation8 + $0x68] sm:$0xff]
    %v349 = vld [vmem:[#allocation8 + $0x70] sm:$0xff]
    %v350 = vld [vmem:[#allocation8 + $0x78] sm:$0xff]
    %v351 = vld [vmem:[#allocation8 + $0x80] sm:$0xff]
    %v352 = vld [vmem:[#allocation8 + $0x88] sm:$0xff]
    %v353 = vld [vmem:[#allocation8 + $0x90] sm:$0xff]
    %v354 = vld [vmem:[#allocation8 + $0x98] sm:$0xff]
    %v355 = vld [vmem:[#allocation8 + $0xa0] sm:$0xff]
    %v356 = vld [vmem:[#allocation8 + $0xa8] sm:$0xff]
    %v357 = vld [vmem:[#allocation8 + $0xb0] sm:$0xff]
    %v358 = vld [vmem:[#allocation8 + $0xb8] sm:$0xff]
    %v359 = vld [vmem:[#allocation8 + $0xc0] sm:$0xff]
    %v360 = vld [vmem:[#allocation8 + $0xc8] sm:$0xff]
    %v361 = vld [vmem:[#allocation8 + $0xd0] sm:$0xff]
    %v362 = vld [vmem:[#allocation8 + $0xd8] sm:$0xff]
    %v363 = vld [vmem:[#allocation8 + $0xe0] sm:$0xff]
    %v364 = vld [vmem:[#allocation8 + $0xe8] sm:$0xff]
    %v365 = vld [vmem:[#allocation8 + $0xf0] sm:$0xff]
    %v366 = vld [vmem:[#allocation8 + $0xf8] sm:$0xff]
    %v369 = vunpack.c.l.b16 %v137
    %v370 = vunpack.c.l.b16 %v138
    %v371 = vpack.c.b16 %v370, %v369
    %v405 = vunpack.c.l.b16 %v335
    %v406 = vunpack.c.h.b16 %v335
    %v407 = vunpack.c.l.b16 %v336
    %v408 = vunpack.c.h.b16 %v336
    %v409 = vunpack.c.l.b16 %v337
    %v410 = vunpack.c.h.b16 %v337
    %v411 = vunpack.c.l.b16 %v338
    %v412 = vunpack.c.h.b16 %v338
    %v413 = vunpack.c.l.b16 %v339
    %v414 = vunpack.c.h.b16 %v339
    %v415 = vunpack.c.l.b16 %v340
    %v416 = vunpack.c.h.b16 %v340
    %v417 = vunpack.c.l.b16 %v341
    %v418 = vunpack.c.h.b16 %v341
    %v419 = vunpack.c.l.b16 %v342
    %v420 = vunpack.c.h.b16 %v342
    %v421 = vunpack.c.l.b16 %v343
    %v422 = vunpack.c.h.b16 %v343
    %v423 = vunpack.c.l.b16 %v344
    %v424 = vunpack.c.h.b16 %v344
    %v425 = vunpack.c.l.b16 %v345
    %v426 = vunpack.c.h.b16 %v345
    %v427 = vunpack.c.l.b16 %v346
    %v428 = vunpack.c.h.b16 %v346
    %v429 = vunpack.c.l.b16 %v347
    %v430 = vunpack.c.h.b16 %v347
    %v431 = vunpack.c.l.b16 %v348
    %v432 = vunpack.c.h.b16 %v348
    %v433 = vunpack.c.l.b16 %v349
    %v434 = vunpack.c.h.b16 %v349
    %v435 = vunpack.c.l.b16 %v350
    %v436 = vunpack.c.h.b16 %v350
    %v437 = vunpack.c.l.b16 %v351
    %v438 = vunpack.c.h.b16 %v351
    %v439 = vunpack.c.l.b16 %v352
    %v440 = vunpack.c.h.b16 %v352
    %v441 = vunpack.c.l.b16 %v353
    %v442 = vunpack.c.h.b16 %v353
    %v443 = vunpack.c.l.b16 %v354
    %v444 = vunpack.c.h.b16 %v354
    %v445 = vunpack.c.l.b16 %v355
    %v446 = vunpack.c.h.b16 %v355
    %v447 = vunpack.c.l.b16 %v356
    %v448 = vunpack.c.h.b16 %v356
    %v449 = vunpack.c.l.b16 %v357
    %v450 = vunpack.c.h.b16 %v357
    %v451 = vunpack.c.l.b16 %v358
    %v452 = vunpack.c.h.b16 %v358
    %v453 = vunpack.c.l.b16 %v359
    %v454 = vunpack.c.h.b16 %v359
    %v455 = vunpack.c.l.b16 %v360
    %v456 = vunpack.c.h.b16 %v360
    %v457 = vunpack.c.l.b16 %v361
    %v458 = vunpack.c.h.b16 %v361
    %v459 = vunpack.c.l.b16 %v362
    %v460 = vunpack.c.h.b16 %v362
    %v461 = vunpack.c.l.b16 %v363
    %v462 = vunpack.c.h.b16 %v363
    %v463 = vunpack.c.l.b16 %v364
    %v464 = vunpack.c.h.b16 %v364
    %v465 = vunpack.c.l.b16 %v365
    %v466 = vunpack.c.h.b16 %v365
    %v467 = vunpack.c.l.b16 %v366
    %v468 = vunpack.c.h.b16 %v366
    %v469 = vpack.c.b16 %v409, %v405
    %v470 = vpack.c.b16 %v410, %v406
    %v471 = vpack.c.b16 %v411, %v407
    %v472 = vpack.c.b16 %v412, %v408
    %v473 = vpack.c.b16 %v417, %v413
    %v474 = vpack.c.b16 %v418, %v414
    %v475 = vpack.c.b16 %v419, %v415
    %v476 = vpack.c.b16 %v420, %v416
    %v477 = vpack.c.b16 %v425, %v421
    %v478 = vpack.c.b16 %v426, %v422
    %v479 = vpack.c.b16 %v427, %v423
    %v480 = vpack.c.b16 %v428, %v424
    %v481 = vpack.c.b16 %v433, %v429
    %v482 = vpack.c.b16 %v434, %v430
    %v483 = vpack.c.b16 %v435, %v431
    %v484 = vpack.c.b16 %v436, %v432
    %v485 = vpack.c.b16 %v441, %v437
    %v486 = vpack.c.b16 %v442, %v438
    %v487 = vpack.c.b16 %v443, %v439
    %v488 = vpack.c.b16 %v444, %v440
    %v489 = vpack.c.b16 %v449, %v445
    %v490 = vpack.c.b16 %v450, %v446
    %v491 = vpack.c.b16 %v451, %v447
    %v492 = vpack.c.b16 %v452, %v448
    %v493 = vpack.c.b16 %v457, %v453
    %v494 = vpack.c.b16 %v458, %v454
    %v495 = vpack.c.b16 %v459, %v455
    %v496 = vpack.c.b16 %v460, %v456
    %v497 = vpack.c.b16 %v465, %v461
    %v498 = vpack.c.b16 %v466, %v462
    %v499 = vpack.c.b16 %v467, %v463
    %v500 = vpack.c.b16 %v468, %v464
    %533 = vmatprep.subr.bf16.mxu0 %v470
    %534 = vmatpush1.bf16.msra.mxu0 %v469
    %535 = vmatprep.subr.bf16.mxu0 %v474
    %536 = vmatpush1.bf16.msra.mxu0 %v473
    %537 = vmatprep.subr.bf16.mxu0 %v478
    %538 = vmatpush1.bf16.msra.mxu0 %v477
    %539 = vmatprep.subr.bf16.mxu0 %v482
    %540 = vmatpush1.bf16.msra.mxu0 %v481
    %541 = vmatprep.subr.bf16.mxu0 %v486
    %542 = vmatpush1.bf16.msra.mxu0 %v485
    %543 = vmatprep.subr.bf16.mxu0 %v490
    %544 = vmatpush1.bf16.msra.mxu0 %v489
    %545 = vmatprep.subr.bf16.mxu0 %v494
    %546 = vmatpush1.bf16.msra.mxu0 %v493
    %547 = vmatprep.subr.bf16.mxu0 %v498
    %548 = vmatpush1.bf16.msra.mxu0 %v497
    %549 = vmatprep.subr.bf16.mxu0 0
    %550 = vmatpush1.bf16.msra.mxu0 0
    %551 = vmatprep.subr.bf16.mxu0 0
    %552 = vmatpush1.bf16.msra.mxu0 0
    %553 = vmatprep.subr.bf16.mxu0 0
    %554 = vmatpush1.bf16.msra.mxu0 0
    %555 = vmatprep.subr.bf16.mxu0 0
    %556 = vmatpush1.bf16.msra.mxu0 0
    %557 = vmatprep.subr.bf16.mxu0 0
    %558 = vmatpush1.bf16.msra.mxu0 0
    %559 = vmatprep.subr.bf16.mxu0 0
    %560 = vmatpush1.bf16.msra.mxu0 0
    %561 = vmatprep.subr.bf16.mxu0 0
    %562 = vmatpush1.bf16.msra.mxu0 0
    %563 = vmatprep.subr.bf16.mxu0 0
    %564 = vmatpush1.bf16.msra.mxu0 0
    %565 = vmatprep.mubr.bf16.mxu0 0
    %566 = vmatmul.mubr.bf16.gmra.mrb[0].mxu0 %v371
    %v567 = vpop.f32.mrb[0].mxu0
    %v568 = vadd.f32 0.0, %v567
    %v569 = vpop.f32.mrb[0].mxu0
    %v570 = vadd.f32 0.0, %v569
    %v571 = vpop.f32.mrb[0].mxu0
    %v572 = vadd.f32 0.0, %v571
    %v573 = vpop.f32.mrb[0].mxu0
    %v574 = vadd.f32 0.0, %v573
    %575 = vdwg.mxu0
    %576 = vmatprep.subr.bf16.mxu0 %v472
    %577 = vmatpush1.bf16.msra.mxu0 %v471
    %578 = vmatprep.subr.bf16.mxu0 %v476
    %579 = vmatpush1.bf16.msra.mxu0 %v475
    %580 = vmatprep.subr.bf16.mxu0 %v480
    %581 = vmatpush1.bf16.msra.mxu0 %v479
    %582 = vmatprep.subr.bf16.mxu0 %v484
    %583 = vmatpush1.bf16.msra.mxu0 %v483
    %584 = vmatprep.subr.bf16.mxu0 %v488
    %585 = vmatpush1.bf16.msra.mxu0 %v487
    %586 = vmatprep.subr.bf16.mxu0 %v492
    %587 = vmatpush1.bf16.msra.mxu0 %v491
    %588 = vmatprep.subr.bf16.mxu0 %v496
    %589 = vmatpush1.bf16.msra.mxu0 %v495
    %590 = vmatprep.subr.bf16.mxu0 %v500
    %591 = vmatpush1.bf16.msra.mxu0 %v499
    %592 = vmatprep.subr.bf16.mxu0 0
    %593 = vmatpush1.bf16.msra.mxu0 0
    %594 = vmatprep.subr.bf16.mxu0 0
    %595 = vmatpush1.bf16.msra.mxu0 0
    %596 = vmatprep.subr.bf16.mxu0 0
    %597 = vmatpush1.bf16.msra.mxu0 0
    %598 = vmatprep.subr.bf16.mxu0 0
    %599 = vmatpush1.bf16.msra.mxu0 0
    %600 = vmatprep.subr.bf16.mxu0 0
    %601 = vmatpush1.bf16.msra.mxu0 0
    %602 = vmatprep.subr.bf16.mxu0 0
    %603 = vmatpush1.bf16.msra.mxu0 0
    %604 = vmatprep.subr.bf16.mxu0 0
    %605 = vmatpush1.bf16.msra.mxu0 0
    %606 = vmatprep.subr.bf16.mxu0 0
    %607 = vmatpush1.bf16.msra.mxu0 0
    %608 = vmatprep.mubr.bf16.mxu0 0
    %609 = vmatmul.mubr.bf16.gmra.mrb[0].mxu0 %v371
    %v610 = vpop.f32.mrb[0].mxu0
    %v611 = vadd.f32 0.0, %v610
    %v612 = vpop.f32.mrb[0].mxu0
    %v613 = vadd.f32 0.0, %v612
    %v614 = vpop.f32.mrb[0].mxu0
    %v615 = vadd.f32 0.0, %v614
    %v616 = vpop.f32.mrb[0].mxu0
    %v617 = vadd.f32 0.0, %v616
    %618 = vdwg.mxu0
    %v815 = vunpack.c.l.b16 %v139
    %v816 = vunpack.c.h.b16 %v139
    %v817 = vunpack.c.l.b16 %v140
    %v818 = vunpack.c.h.b16 %v140
    %v819 = vunpack.c.l.b16 %v141
    %v820 = vunpack.c.h.b16 %v141
    %v821 = vunpack.c.l.b16 %v142
    %v822 = vunpack.c.h.b16 %v142
    %v823 = vunpack.c.l.b16 %v143
    %v824 = vunpack.c.h.b16 %v143
    %v825 = vunpack.c.l.b16 %v144
    %v826 = vunpack.c.h.b16 %v144
    %v827 = vunpack.c.l.b16 %v145
    %v828 = vunpack.c.h.b16 %v145
    %v829 = vunpack.c.l.b16 %v146
    %v830 = vunpack.c.h.b16 %v146
    %v831 = vunpack.c.l.b16 %v147
    %v832 = vunpack.c.h.b16 %v147
    %v833 = vunpack.c.l.b16 %v148
    %v834 = vunpack.c.h.b16 %v148
    %v835 = vunpack.c.l.b16 %v149
    %v836 = vunpack.c.h.b16 %v149
    %v837 = vunpack.c.l.b16 %v150
    %v838 = vunpack.c.h.b16 %v150
    %v839 = vunpack.c.l.b16 %v151
    %v840 = vunpack.c.h.b16 %v151
    %v841 = vunpack.c.l.b16 %v152
    %v842 = vunpack.c.h.b16 %v152
    %v843 = vunpack.c.l.b16 %v153
    %v844 = vunpack.c.h.b16 %v153
    %v845 = vunpack.c.l.b16 %v154
    %v846 = vunpack.c.h.b16 %v154
    %v847 = vunpack.c.l.b16 %v155
    %v848 = vunpack.c.h.b16 %v155
    %v849 = vunpack.c.l.b16 %v156
    %v850 = vunpack.c.h.b16 %v156
    %v851 = vunpack.c.l.b16 %v157
    %v852 = vunpack.c.h.b16 %v157
    %v853 = vunpack.c.l.b16 %v158
    %v854 = vunpack.c.h.b16 %v158
    %v855 = vunpack.c.l.b16 %v159
    %v856 = vunpack.c.h.b16 %v159
    %v857 = vunpack.c.l.b16 %v160
    %v858 = vunpack.c.h.b16 %v160
    %v859 = vunpack.c.l.b16 %v161
    %v860 = vunpack.c.h.b16 %v161
    %v861 = vunpack.c.l.b16 %v162
    %v862 = vunpack.c.h.b16 %v162
    %v863 = vunpack.c.l.b16 %v163
    %v864 = vunpack.c.h.b16 %v163
    %v865 = vunpack.c.l.b16 %v164
    %v866 = vunpack.c.h.b16 %v164
    %v867 = vunpack.c.l.b16 %v165
    %v868 = vunpack.c.h.b16 %v165
    %v869 = vunpack.c.l.b16 %v166
    %v870 = vunpack.c.h.b16 %v166
    %v871 = vunpack.c.l.b16 %v167
    %v872 = vunpack.c.h.b16 %v167
    %v873 = vunpack.c.l.b16 %v168
    %v874 = vunpack.c.h.b16 %v168
    %v875 = vunpack.c.l.b16 %v169
    %v876 = vunpack.c.h.b16 %v169
    %v877 = vunpack.c.l.b16 %v170
    %v878 = vunpack.c.h.b16 %v170
    %v879 = vunpack.c.l.b16 %v171
    %v880 = vunpack.c.h.b16 %v171
    %v881 = vunpack.c.l.b16 %v172
    %v882 = vunpack.c.h.b16 %v172
    %v883 = vunpack.c.l.b16 %v173
    %v884 = vunpack.c.h.b16 %v173
    %v885 = vunpack.c.l.b16 %v174
    %v886 = vunpack.c.h.b16 %v174
    %v887 = vunpack.c.l.b16 %v175
    %v888 = vunpack.c.h.b16 %v175
    %v889 = vunpack.c.l.b16 %v176
    %v890 = vunpack.c.h.b16 %v176
    %v891 = vunpack.c.l.b16 %v177
    %v892 = vunpack.c.h.b16 %v177
    %v893 = vunpack.c.l.b16 %v178
    %v894 = vunpack.c.h.b16 %v178
    %v895 = vunpack.c.l.b16 %v179
    %v896 = vunpack.c.h.b16 %v179
    %v897 = vunpack.c.l.b16 %v180
    %v898 = vunpack.c.h.b16 %v180
    %v899 = vunpack.c.l.b16 %v181
    %v900 = vunpack.c.h.b16 %v181
    %v901 = vunpack.c.l.b16 %v182
    %v902 = vunpack.c.h.b16 %v182
    %v903 = vunpack.c.l.b16 %v183
    %v904 = vunpack.c.h.b16 %v183
    %v905 = vunpack.c.l.b16 %v184
    %v906 = vunpack.c.h.b16 %v184
    %v907 = vunpack.c.l.b16 %v185
    %v908 = vunpack.c.h.b16 %v185
    %v909 = vunpack.c.l.b16 %v186
    %v910 = vunpack.c.h.b16 %v186
    %v911 = vunpack.c.l.b16 %v187
    %v912 = vunpack.c.h.b16 %v187
    %v913 = vunpack.c.l.b16 %v188
    %v914 = vunpack.c.h.b16 %v188
    %v915 = vunpack.c.l.b16 %v189
    %v916 = vunpack.c.h.b16 %v189
    %v917 = vunpack.c.l.b16 %v190
    %v918 = vunpack.c.h.b16 %v190
    %v919 = vunpack.c.l.b16 %v191
    %v920 = vunpack.c.h.b16 %v191
    %v921 = vunpack.c.l.b16 %v192
    %v922 = vunpack.c.h.b16 %v192
    %v923 = vunpack.c.l.b16 %v193
    %v924 = vunpack.c.h.b16 %v193
    %v925 = vunpack.c.l.b16 %v194
    %v926 = vunpack.c.h.b16 %v194
    %v927 = vunpack.c.l.b16 %v195
    %v928 = vunpack.c.h.b16 %v195
    %v929 = vunpack.c.l.b16 %v196
    %v930 = vunpack.c.h.b16 %v196
    %v931 = vunpack.c.l.b16 %v197
    %v932 = vunpack.c.h.b16 %v197
    %v933 = vunpack.c.l.b16 %v198
    %v934 = vunpack.c.h.b16 %v198
    %v935 = vunpack.c.l.b16 %v199
    %v936 = vunpack.c.h.b16 %v199
    %v937 = vunpack.c.l.b16 %v200
    %v938 = vunpack.c.h.b16 %v200
    %v939 = vunpack.c.l.b16 %v201
    %v940 = vunpack.c.h.b16 %v201
    %v941 = vunpack.c.l.b16 %v202
    %v942 = vunpack.c.h.b16 %v202
    %v943 = vunpack.c.l.b16 %v203
    %v944 = vunpack.c.h.b16 %v203
    %v945 = vunpack.c.l.b16 %v204
    %v946 = vunpack.c.h.b16 %v204
    %v947 = vunpack.c.l.b16 %v205
    %v948 = vunpack.c.h.b16 %v205
    %v949 = vunpack.c.l.b16 %v206
    %v950 = vunpack.c.h.b16 %v206
    %v951 = vunpack.c.l.b16 %v207
    %v952 = vunpack.c.h.b16 %v207
    %v953 = vunpack.c.l.b16 %v208
    %v954 = vunpack.c.h.b16 %v208
    %v955 = vunpack.c.l.b16 %v209
    %v956 = vunpack.c.h.b16 %v209
    %v957 = vunpack.c.l.b16 %v210
    %v958 = vunpack.c.h.b16 %v210
    %v959 = vunpack.c.l.b16 %v211
    %v960 = vunpack.c.h.b16 %v211
    %v961 = vunpack.c.l.b16 %v212
    %v962 = vunpack.c.h.b16 %v212
    %v963 = vunpack.c.l.b16 %v213
    %v964 = vunpack.c.h.b16 %v213
    %v965 = vunpack.c.l.b16 %v214
    %v966 = vunpack.c.h.b16 %v214
    %v967 = vunpack.c.l.b16 %v215
    %v968 = vunpack.c.h.b16 %v215
    %v969 = vunpack.c.l.b16 %v216
    %v970 = vunpack.c.h.b16 %v216
    %v971 = vunpack.c.l.b16 %v217
    %v972 = vunpack.c.h.b16 %v217
    %v973 = vunpack.c.l.b16 %v218
    %v974 = vunpack.c.h.b16 %v218
    %v975 = vunpack.c.l.b16 %v219
    %v976 = vunpack.c.h.b16 %v219
    %v977 = vunpack.c.l.b16 %v220
    %v978 = vunpack.c.h.b16 %v220
    %v979 = vunpack.c.l.b16 %v221
    %v980 = vunpack.c.h.b16 %v221
    %v981 = vunpack.c.l.b16 %v222
    %v982 = vunpack.c.h.b16 %v222
    %v983 = vunpack.c.l.b16 %v223
    %v984 = vunpack.c.h.b16 %v223
    %v985 = vunpack.c.l.b16 %v224
    %v986 = vunpack.c.h.b16 %v224
    %v987 = vunpack.c.l.b16 %v225
    %v988 = vunpack.c.h.b16 %v225
    %v989 = vunpack.c.l.b16 %v226
    %v990 = vunpack.c.h.b16 %v226
    %v991 = vunpack.c.l.b16 %v227
    %v992 = vunpack.c.h.b16 %v227
    %v993 = vunpack.c.l.b16 %v228
    %v994 = vunpack.c.h.b16 %v228
    %v995 = vunpack.c.l.b16 %v229
    %v996 = vunpack.c.h.b16 %v229
    %v997 = vunpack.c.l.b16 %v230
    %v998 = vunpack.c.h.b16 %v230
    %v999 = vunpack.c.l.b16 %v231
    %v1000 = vunpack.c.h.b16 %v231
    %v1001 = vunpack.c.l.b16 %v232
    %v1002 = vunpack.c.h.b16 %v232
    %v1003 = vunpack.c.l.b16 %v233
    %v1004 = vunpack.c.h.b16 %v233
    %v1005 = vunpack.c.l.b16 %v234
    %v1006 = vunpack.c.h.b16 %v234
    %v1007 = vunpack.c.l.b16 %v235
    %v1008 = vunpack.c.h.b16 %v235
    %v1009 = vunpack.c.l.b16 %v236
    %v1010 = vunpack.c.h.b16 %v236
    %v1011 = vunpack.c.l.b16 %v237
    %v1012 = vunpack.c.h.b16 %v237
    %v1013 = vunpack.c.l.b16 %v238
    %v1014 = vunpack.c.h.b16 %v238
    %v1015 = vunpack.c.l.b16 %v239
    %v1016 = vunpack.c.h.b16 %v239
    %v1017 = vunpack.c.l.b16 %v240
    %v1018 = vunpack.c.h.b16 %v240
    %v1019 = vunpack.c.l.b16 %v241
    %v1020 = vunpack.c.h.b16 %v241
    %v1021 = vunpack.c.l.b16 %v242
    %v1022 = vunpack.c.h.b16 %v242
    %v1023 = vunpack.c.l.b16 %v243
    %v1024 = vunpack.c.h.b16 %v243
    %v1025 = vunpack.c.l.b16 %v244
    %v1026 = vunpack.c.h.b16 %v244
    %v1027 = vunpack.c.l.b16 %v245
    %v1028 = vunpack.c.h.b16 %v245
    %v1029 = vunpack.c.l.b16 %v246
    %v1030 = vunpack.c.h.b16 %v246
    %v1031 = vunpack.c.l.b16 %v247
    %v1032 = vunpack.c.h.b16 %v247
    %v1033 = vunpack.c.l.b16 %v248
    %v1034 = vunpack.c.h.b16 %v248
    %v1035 = vunpack.c.l.b16 %v249
    %v1036 = vunpack.c.h.b16 %v249
    %v1037 = vunpack.c.l.b16 %v250
    %v1038 = vunpack.c.h.b16 %v250
    %v1039 = vunpack.c.l.b16 %v251
    %v1040 = vunpack.c.h.b16 %v251
    %v1041 = vunpack.c.l.b16 %v252
    %v1042 = vunpack.c.h.b16 %v252
    %v1043 = vunpack.c.l.b16 %v253
    %v1044 = vunpack.c.h.b16 %v253
    %v1045 = vunpack.c.l.b16 %v254
    %v1046 = vunpack.c.h.b16 %v254
    %v1047 = vunpack.c.l.b16 %v255
    %v1048 = vunpack.c.h.b16 %v255
    %v1049 = vunpack.c.l.b16 %v256
    %v1050 = vunpack.c.h.b16 %v256
    %v1051 = vunpack.c.l.b16 %v257
    %v1052 = vunpack.c.h.b16 %v257
    %v1053 = vunpack.c.l.b16 %v258
    %v1054 = vunpack.c.h.b16 %v258
    %v1055 = vunpack.c.l.b16 %v259
    %v1056 = vunpack.c.h.b16 %v259
    %v1057 = vunpack.c.l.b16 %v260
    %v1058 = vunpack.c.h.b16 %v260
    %v1059 = vunpack.c.l.b16 %v261
    %v1060 = vunpack.c.h.b16 %v261
    %v1061 = vunpack.c.l.b16 %v262
    %v1062 = vunpack.c.h.b16 %v262
    %v1063 = vunpack.c.l.b16 %v263
    %v1064 = vunpack.c.h.b16 %v263
    %v1065 = vunpack.c.l.b16 %v264
    %v1066 = vunpack.c.h.b16 %v264
    %v1067 = vunpack.c.l.b16 %v265
    %v1068 = vunpack.c.h.b16 %v265
    %v1069 = vunpack.c.l.b16 %v266
    %v1070 = vunpack.c.h.b16 %v266
    %v1071 = vunpack.c.l.b16 %v267
    %v1072 = vunpack.c.h.b16 %v267
    %v1073 = vunpack.c.l.b16 %v268
    %v1074 = vunpack.c.h.b16 %v268
    %v1075 = vunpack.c.l.b16 %v269
    %v1076 = vunpack.c.h.b16 %v269
    %v1077 = vunpack.c.l.b16 %v270
    %v1078 = vunpack.c.h.b16 %v270
    %v1079 = vunpack.c.l.b16 %v271
    %v1080 = vunpack.c.h.b16 %v271
    %v1081 = vunpack.c.l.b16 %v272
    %v1082 = vunpack.c.h.b16 %v272
    %v1083 = vunpack.c.l.b16 %v273
    %v1084 = vunpack.c.h.b16 %v273
    %v1085 = vunpack.c.l.b16 %v274
    %v1086 = vunpack.c.h.b16 %v274
    %v1087 = vunpack.c.l.b16 %v275
    %v1088 = vunpack.c.h.b16 %v275
    %v1089 = vunpack.c.l.b16 %v276
    %v1090 = vunpack.c.h.b16 %v276
    %v1091 = vunpack.c.l.b16 %v277
    %v1092 = vunpack.c.h.b16 %v277
    %v1093 = vunpack.c.l.b16 %v278
    %v1094 = vunpack.c.h.b16 %v278
    %v1095 = vunpack.c.l.b16 %v279
    %v1096 = vunpack.c.h.b16 %v279
    %v1097 = vunpack.c.l.b16 %v280
    %v1098 = vunpack.c.h.b16 %v280
    %v1099 = vunpack.c.l.b16 %v281
    %v1100 = vunpack.c.h.b16 %v281
    %v1101 = vunpack.c.l.b16 %v282
    %v1102 = vunpack.c.h.b16 %v282
    %v1103 = vunpack.c.l.b16 %v283
    %v1104 = vunpack.c.h.b16 %v283
    %v1105 = vunpack.c.l.b16 %v284
    %v1106 = vunpack.c.h.b16 %v284
    %v1107 = vunpack.c.l.b16 %v285
    %v1108 = vunpack.c.h.b16 %v285
    %v1109 = vunpack.c.l.b16 %v286
    %v1110 = vunpack.c.h.b16 %v286
    %v1111 = vunpack.c.l.b16 %v287
    %v1112 = vunpack.c.h.b16 %v287
    %v1113 = vunpack.c.l.b16 %v288
    %v1114 = vunpack.c.h.b16 %v288
    %v1115 = vunpack.c.l.b16 %v289
    %v1116 = vunpack.c.h.b16 %v289
    %v1117 = vunpack.c.l.b16 %v290
    %v1118 = vunpack.c.h.b16 %v290
    %v1119 = vunpack.c.l.b16 %v291
    %v1120 = vunpack.c.h.b16 %v291
    %v1121 = vunpack.c.l.b16 %v292
    %v1122 = vunpack.c.h.b16 %v292
    %v1123 = vunpack.c.l.b16 %v293
    %v1124 = vunpack.c.h.b16 %v293
    %v1125 = vunpack.c.l.b16 %v294
    %v1126 = vunpack.c.h.b16 %v294
    %v1127 = vunpack.c.l.b16 %v295
    %v1128 = vunpack.c.h.b16 %v295
    %v1129 = vunpack.c.l.b16 %v296
    %v1130 = vunpack.c.h.b16 %v296
    %v1131 = vunpack.c.l.b16 %v297
    %v1132 = vunpack.c.h.b16 %v297
    %v1133 = vunpack.c.l.b16 %v298
    %v1134 = vunpack.c.h.b16 %v298
    %v1135 = vunpack.c.l.b16 %v299
    %v1136 = vunpack.c.h.b16 %v299
    %v1137 = vunpack.c.l.b16 %v300
    %v1138 = vunpack.c.h.b16 %v300
    %v1139 = vunpack.c.l.b16 %v301
    %v1140 = vunpack.c.h.b16 %v301
    %v1141 = vunpack.c.l.b16 %v302
    %v1142 = vunpack.c.h.b16 %v302
    %v1143 = vunpack.c.l.b16 %v303
    %v1144 = vunpack.c.h.b16 %v303
    %v1145 = vunpack.c.l.b16 %v304
    %v1146 = vunpack.c.h.b16 %v304
    %v1147 = vunpack.c.l.b16 %v305
    %v1148 = vunpack.c.h.b16 %v305
    %v1149 = vunpack.c.l.b16 %v306
    %v1150 = vunpack.c.h.b16 %v306
    %v1151 = vunpack.c.l.b16 %v307
    %v1152 = vunpack.c.h.b16 %v307
    %v1153 = vunpack.c.l.b16 %v308
    %v1154 = vunpack.c.h.b16 %v308
    %v1155 = vunpack.c.l.b16 %v309
    %v1156 = vunpack.c.h.b16 %v309
    %v1157 = vunpack.c.l.b16 %v310
    %v1158 = vunpack.c.h.b16 %v310
    %v1159 = vunpack.c.l.b16 %v311
    %v1160 = vunpack.c.h.b16 %v311
    %v1161 = vunpack.c.l.b16 %v312
    %v1162 = vunpack.c.h.b16 %v312
    %v1163 = vunpack.c.l.b16 %v313
    %v1164 = vunpack.c.h.b16 %v313
    %v1165 = vunpack.c.l.b16 %v314
    %v1166 = vunpack.c.h.b16 %v314
    %v1167 = vunpack.c.l.b16 %v315
    %v1168 = vunpack.c.h.b16 %v315
    %v1169 = vunpack.c.l.b16 %v316
    %v1170 = vunpack.c.h.b16 %v316
    %v1171 = vunpack.c.l.b16 %v317
    %v1172 = vunpack.c.h.b16 %v317
    %v1173 = vunpack.c.l.b16 %v318
    %v1174 = vunpack.c.h.b16 %v318
    %v1175 = vunpack.c.l.b16 %v319
    %v1176 = vunpack.c.h.b16 %v319
    %v1177 = vunpack.c.l.b16 %v320
    %v1178 = vunpack.c.h.b16 %v320
    %v1179 = vunpack.c.l.b16 %v321
    %v1180 = vunpack.c.h.b16 %v321
    %v1181 = vunpack.c.l.b16 %v322
    %v1182 = vunpack.c.h.b16 %v322
    %v1183 = vunpack.c.l.b16 %v323
    %v1184 = vunpack.c.h.b16 %v323
    %v1185 = vunpack.c.l.b16 %v324
    %v1186 = vunpack.c.h.b16 %v324
    %v1187 = vunpack.c.l.b16 %v325
    %v1188 = vunpack.c.h.b16 %v325
    %v1189 = vunpack.c.l.b16 %v326
    %v1190 = vunpack.c.h.b16 %v326
    %v1191 = vunpack.c.l.b16 %v327
    %v1192 = vunpack.c.h.b16 %v327
    %v1193 = vunpack.c.l.b16 %v328
    %v1194 = vunpack.c.h.b16 %v328
    %v1195 = vunpack.c.l.b16 %v329
    %v1196 = vunpack.c.h.b16 %v329
    %v1197 = vunpack.c.l.b16 %v330
    %v1198 = vunpack.c.h.b16 %v330
    %v1199 = vunpack.c.l.b16 %v331
    %v1200 = vunpack.c.h.b16 %v331
    %v1201 = vunpack.c.l.b16 %v332
    %v1202 = vunpack.c.h.b16 %v332
    %v1203 = vunpack.c.l.b16 %v333
    %v1204 = vunpack.c.h.b16 %v333
    %v1205 = vunpack.c.l.b16 %v334
    %v1206 = vunpack.c.h.b16 %v334
    %v1207 = vpack.c.b16 %v819, %v815
    %v1208 = vpack.c.b16 %v820, %v816
    %v1209 = vpack.c.b16 %v821, %v817
    %v1210 = vpack.c.b16 %v822, %v818
    %v1211 = vpack.c.b16 %v827, %v823
    %v1212 = vpack.c.b16 %v828, %v824
    %v1213 = vpack.c.b16 %v829, %v825
    %v1214 = vpack.c.b16 %v830, %v826
    %v1215 = vpack.c.b16 %v835, %v831
    %v1216 = vpack.c.b16 %v836, %v832
    %v1217 = vpack.c.b16 %v837, %v833
    %v1218 = vpack.c.b16 %v838, %v834
    %v1219 = vpack.c.b16 %v843, %v839
    %v1220 = vpack.c.b16 %v844, %v840
    %v1221 = vpack.c.b16 %v845, %v841
    %v1222 = vpack.c.b16 %v846, %v842
    %v1223 = vpack.c.b16 %v851, %v847
    %v1224 = vpack.c.b16 %v852, %v848
    %v1225 = vpack.c.b16 %v853, %v849
    %v1226 = vpack.c.b16 %v854, %v850
    %v1227 = vpack.c.b16 %v859, %v855
    %v1228 = vpack.c.b16 %v860, %v856
    %v1229 = vpack.c.b16 %v861, %v857
    %v1230 = vpack.c.b16 %v862, %v858
    %v1231 = vpack.c.b16 %v867, %v863
    %v1232 = vpack.c.b16 %v868, %v864
    %v1233 = vpack.c.b16 %v869, %v865
    %v1234 = vpack.c.b16 %v870, %v866
    %v1235 = vpack.c.b16 %v875, %v871
    %v1236 = vpack.c.b16 %v876, %v872
    %v1237 = vpack.c.b16 %v877, %v873
    %v1238 = vpack.c.b16 %v878, %v874
    %v1239 = vpack.c.b16 %v883, %v879
    %v1240 = vpack.c.b16 %v884, %v880
    %v1241 = vpack.c.b16 %v885, %v881
    %v1242 = vpack.c.b16 %v886, %v882
    %v1243 = vpack.c.b16 %v891, %v887
    %v1244 = vpack.c.b16 %v892, %v888
    %v1245 = vpack.c.b16 %v893, %v889
    %v1246 = vpack.c.b16 %v894, %v890
    %v1247 = vpack.c.b16 %v899, %v895
    %v1248 = vpack.c.b16 %v900, %v896
    %v1249 = vpack.c.b16 %v901, %v897
    %v1250 = vpack.c.b16 %v902, %v898
    %v1251 = vpack.c.b16 %v907, %v903
    %v1252 = vpack.c.b16 %v908, %v904
    %v1253 = vpack.c.b16 %v909, %v905
    %v1254 = vpack.c.b16 %v910, %v906
    %v1255 = vpack.c.b16 %v915, %v911
    %v1256 = vpack.c.b16 %v916, %v912
    %v1257 = vpack.c.b16 %v917, %v913
    %v1258 = vpack.c.b16 %v918, %v914
    %v1259 = vpack.c.b16 %v923, %v919
    %v1260 = vpack.c.b16 %v924, %v920
    %v1261 = vpack.c.b16 %v925, %v921
    %v1262 = vpack.c.b16 %v926, %v922
    %v1263 = vpack.c.b16 %v931, %v927
    %v1264 = vpack.c.b16 %v932, %v928
    %v1265 = vpack.c.b16 %v933, %v929
    %v1266 = vpack.c.b16 %v934, %v930
    %v1267 = vpack.c.b16 %v939, %v935
    %v1268 = vpack.c.b16 %v940, %v936
    %v1269 = vpack.c.b16 %v941, %v937
    %v1270 = vpack.c.b16 %v942, %v938
    %v1271 = vpack.c.b16 %v947, %v943
    %v1272 = vpack.c.b16 %v948, %v944
    %v1273 = vpack.c.b16 %v949, %v945
    %v1274 = vpack.c.b16 %v950, %v946
    %v1275 = vpack.c.b16 %v955, %v951
    %v1276 = vpack.c.b16 %v956, %v952
    %v1277 = vpack.c.b16 %v957, %v953
    %v1278 = vpack.c.b16 %v958, %v954
    %v1279 = vpack.c.b16 %v963, %v959
    %v1280 = vpack.c.b16 %v964, %v960
    %v1281 = vpack.c.b16 %v965, %v961
    %v1282 = vpack.c.b16 %v966, %v962
    %v1283 = vpack.c.b16 %v971, %v967
    %v1284 = vpack.c.b16 %v972, %v968
    %v1285 = vpack.c.b16 %v973, %v969
    %v1286 = vpack.c.b16 %v974, %v970
    %v1287 = vpack.c.b16 %v979, %v975
    %v1288 = vpack.c.b16 %v980, %v976
    %v1289 = vpack.c.b16 %v981, %v977
    %v1290 = vpack.c.b16 %v982, %v978
    %v1291 = vpack.c.b16 %v987, %v983
    %v1292 = vpack.c.b16 %v988, %v984
    %v1293 = vpack.c.b16 %v989, %v985
    %v1294 = vpack.c.b16 %v990, %v986
    %v1295 = vpack.c.b16 %v995, %v991
    %v1296 = vpack.c.b16 %v996, %v992
    %v1297 = vpack.c.b16 %v997, %v993
    %v1298 = vpack.c.b16 %v998, %v994
    %v1299 = vpack.c.b16 %v1003, %v999
    %v1300 = vpack.c.b16 %v1004, %v1000
    %v1301 = vpack.c.b16 %v1005, %v1001
    %v1302 = vpack.c.b16 %v1006, %v1002
    %v1303 = vpack.c.b16 %v1011, %v1007
    %v1304 = vpack.c.b16 %v1012, %v1008
    %v1305 = vpack.c.b16 %v1013, %v1009
    %v1306 = vpack.c.b16 %v1014, %v1010
    %v1307 = vpack.c.b16 %v1019, %v1015
    %v1308 = vpack.c.b16 %v1020, %v1016
    %v1309 = vpack.c.b16 %v1021, %v1017
    %v1310 = vpack.c.b16 %v1022, %v1018
    %v1311 = vpack.c.b16 %v1027, %v1023
    %v1312 = vpack.c.b16 %v1028, %v1024
    %v1313 = vpack.c.b16 %v1029, %v1025
    %v1314 = vpack.c.b16 %v1030, %v1026
    %v1315 = vpack.c.b16 %v1035, %v1031
    %v1316 = vpack.c.b16 %v1036, %v1032
    %v1317 = vpack.c.b16 %v1037, %v1033
    %v1318 = vpack.c.b16 %v1038, %v1034
    %v1319 = vpack.c.b16 %v1043, %v1039
    %v1320 = vpack.c.b16 %v1044, %v1040
    %v1321 = vpack.c.b16 %v1045, %v1041
    %v1322 = vpack.c.b16 %v1046, %v1042
    %v1323 = vpack.c.b16 %v1051, %v1047
    %v1324 = vpack.c.b16 %v1052, %v1048
    %v1325 = vpack.c.b16 %v1053, %v1049
    %v1326 = vpack.c.b16 %v1054, %v1050
    %v1327 = vpack.c.b16 %v1059, %v1055
    %v1328 = vpack.c.b16 %v1060, %v1056
    %v1329 = vpack.c.b16 %v1061, %v1057
    %v1330 = vpack.c.b16 %v1062, %v1058
    %v1331 = vpack.c.b16 %v1067, %v1063
    %v1332 = vpack.c.b16 %v1068, %v1064
    %v1333 = vpack.c.b16 %v1069, %v1065
    %v1334 = vpack.c.b16 %v1070, %v1066
    %v1335 = vpack.c.b16 %v1075, %v1071
    %v1336 = vpack.c.b16 %v1076, %v1072
    %v1337 = vpack.c.b16 %v1077, %v1073
    %v1338 = vpack.c.b16 %v1078, %v1074
    %v1339 = vpack.c.b16 %v1083, %v1079
    %v1340 = vpack.c.b16 %v1084, %v1080
    %v1341 = vpack.c.b16 %v1085, %v1081
    %v1342 = vpack.c.b16 %v1086, %v1082
    %v1343 = vpack.c.b16 %v1091, %v1087
    %v1344 = vpack.c.b16 %v1092, %v1088
    %v1345 = vpack.c.b16 %v1093, %v1089
    %v1346 = vpack.c.b16 %v1094, %v1090
    %v1347 = vpack.c.b16 %v1099, %v1095
    %v1348 = vpack.c.b16 %v1100, %v1096
    %v1349 = vpack.c.b16 %v1101, %v1097
    %v1350 = vpack.c.b16 %v1102, %v1098
    %v1351 = vpack.c.b16 %v1107, %v1103
    %v1352 = vpack.c.b16 %v1108, %v1104
    %v1353 = vpack.c.b16 %v1109, %v1105
    %v1354 = vpack.c.b16 %v1110, %v1106
    %v1355 = vpack.c.b16 %v1115, %v1111
    %v1356 = vpack.c.b16 %v1116, %v1112
    %v1357 = vpack.c.b16 %v1117, %v1113
    %v1358 = vpack.c.b16 %v1118, %v1114
    %v1359 = vpack.c.b16 %v1123, %v1119
    %v1360 = vpack.c.b16 %v1124, %v1120
    %v1361 = vpack.c.b16 %v1125, %v1121
    %v1362 = vpack.c.b16 %v1126, %v1122
    %v1363 = vpack.c.b16 %v1131, %v1127
    %v1364 = vpack.c.b16 %v1132, %v1128
    %v1365 = vpack.c.b16 %v1133, %v1129
    %v1366 = vpack.c.b16 %v1134, %v1130
    %v1367 = vpack.c.b16 %v1139, %v1135
    %v1368 = vpack.c.b16 %v1140, %v1136
    %v1369 = vpack.c.b16 %v1141, %v1137
    %v1370 = vpack.c.b16 %v1142, %v1138
    %v1371 = vpack.c.b16 %v1147, %v1143
    %v1372 = vpack.c.b16 %v1148, %v1144
    %v1373 = vpack.c.b16 %v1149, %v1145
    %v1374 = vpack.c.b16 %v1150, %v1146
    %v1375 = vpack.c.b16 %v1155, %v1151
    %v1376 = vpack.c.b16 %v1156, %v1152
    %v1377 = vpack.c.b16 %v1157, %v1153
    %v1378 = vpack.c.b16 %v1158, %v1154
    %v1379 = vpack.c.b16 %v1163, %v1159
    %v1380 = vpack.c.b16 %v1164, %v1160
    %v1381 = vpack.c.b16 %v1165, %v1161
    %v1382 = vpack.c.b16 %v1166, %v1162
    %v1383 = vpack.c.b16 %v1171, %v1167
    %v1384 = vpack.c.b16 %v1172, %v1168
    %v1385 = vpack.c.b16 %v1173, %v1169
    %v1386 = vpack.c.b16 %v1174, %v1170
    %v1387 = vpack.c.b16 %v1179, %v1175
    %v1388 = vpack.c.b16 %v1180, %v1176
    %v1389 = vpack.c.b16 %v1181, %v1177
    %v1390 = vpack.c.b16 %v1182, %v1178
    %v1391 = vpack.c.b16 %v1187, %v1183
    %v1392 = vpack.c.b16 %v1188, %v1184
    %v1393 = vpack.c.b16 %v1189, %v1185
    %v1394 = vpack.c.b16 %v1190, %v1186
    %v1395 = vpack.c.b16 %v1195, %v1191
    %v1396 = vpack.c.b16 %v1196, %v1192
    %v1397 = vpack.c.b16 %v1197, %v1193
    %v1398 = vpack.c.b16 %v1198, %v1194
    %v1399 = vpack.c.b16 %v1203, %v1199
    %v1400 = vpack.c.b16 %v1204, %v1200
    %v1401 = vpack.c.b16 %v1205, %v1201
    %v1402 = vpack.c.b16 %v1206, %v1202
    %vm1599 = vcmask 130048
    %v1601 = vsel %vm1599, %v136, 0
    %1603 = vmatprep.subr.bf16.mxu0 %v1208
    %1604 = vmatpush1.bf16.msra.mxu0 %v1207
    %1605 = vmatprep.subr.bf16.mxu0 %v1212
    %1606 = vmatpush1.bf16.msra.mxu0 %v1211
    %1607 = vmatprep.subr.bf16.mxu0 %v1216
    %1608 = vmatpush1.bf16.msra.mxu0 %v1215
    %1609 = vmatprep.subr.bf16.mxu0 %v1220
    %1610 = vmatpush1.bf16.msra.mxu0 %v1219
    %1611 = vmatprep.subr.bf16.mxu0 %v1224
    %1612 = vmatpush1.bf16.msra.mxu0 %v1223
    %1613 = vmatprep.subr.bf16.mxu0 %v1228
    %1614 = vmatpush1.bf16.msra.mxu0 %v1227
    %1615 = vmatprep.subr.bf16.mxu0 %v1232
    %1616 = vmatpush1.bf16.msra.mxu0 %v1231
    %1617 = vmatprep.subr.bf16.mxu0 %v1236
    %1618 = vmatpush1.bf16.msra.mxu0 %v1235
    %1619 = vmatprep.subr.bf16.mxu0 %v1240
    %1620 = vmatpush1.bf16.msra.mxu0 %v1239
    %1621 = vmatprep.subr.bf16.mxu0 %v1244
    %1622 = vmatpush1.bf16.msra.mxu0 %v1243
    %1623 = vmatprep.subr.bf16.mxu0 %v1248
    %1624 = vmatpush1.bf16.msra.mxu0 %v1247
    %1625 = vmatprep.subr.bf16.mxu0 %v1252
    %1626 = vmatpush1.bf16.msra.mxu0 %v1251
    %1627 = vmatprep.subr.bf16.mxu0 %v1256
    %1628 = vmatpush1.bf16.msra.mxu0 %v1255
    %1629 = vmatprep.subr.bf16.mxu0 %v1260
    %1630 = vmatpush1.bf16.msra.mxu0 %v1259
    %1631 = vmatprep.subr.bf16.mxu0 %v1264
    %1632 = vmatpush1.bf16.msra.mxu0 %v1263
    %1633 = vmatprep.subr.bf16.mxu0 %v1268
    %1634 = vmatpush1.bf16.msra.mxu0 %v1267
    %1635 = vmatprep.mubr.bf16.mxu0 %v131
    %1636 = vmatmul.mubr.bf16.gmra.mrb[0].mxu0 %v130
    %v1637 = vpop.f32.mrb[0].mxu0
    %v1638 = vadd.f32 %v568, %v1637
    %v1639 = vpop.f32.mrb[0].mxu0
    %v1640 = vadd.f32 %v570, %v1639
    %v1641 = vpop.f32.mrb[0].mxu0
    %v1642 = vadd.f32 %v572, %v1641
    %v1643 = vpop.f32.mrb[0].mxu0
    %v1644 = vadd.f32 %v574, %v1643
    %1645 = vdwg.mxu0
    %1646 = vmatprep.subr.bf16.mxu0 %v1272
    %1647 = vmatpush1.bf16.msra.mxu0 %v1271
    %1648 = vmatprep.subr.bf16.mxu0 %v1276
    %1649 = vmatpush1.bf16.msra.mxu0 %v1275
    %1650 = vmatprep.subr.bf16.mxu0 %v1280
    %1651 = vmatpush1.bf16.msra.mxu0 %v1279
    %1652 = vmatprep.subr.bf16.mxu0 %v1284
    %1653 = vmatpush1.bf16.msra.mxu0 %v1283
    %1654 = vmatprep.subr.bf16.mxu0 %v1288
    %1655 = vmatpush1.bf16.msra.mxu0 %v1287
    %1656 = vmatprep.subr.bf16.mxu0 %v1292
    %1657 = vmatpush1.bf16.msra.mxu0 %v1291
    %1658 = vmatprep.subr.bf16.mxu0 %v1296
    %1659 = vmatpush1.bf16.msra.mxu0 %v1295
    %1660 = vmatprep.subr.bf16.mxu0 %v1300
    %1661 = vmatpush1.bf16.msra.mxu0 %v1299
    %1662 = vmatprep.subr.bf16.mxu0 %v1304
    %1663 = vmatpush1.bf16.msra.mxu0 %v1303
    %1664 = vmatprep.subr.bf16.mxu0 %v1308
    %1665 = vmatpush1.bf16.msra.mxu0 %v1307
    %1666 = vmatprep.subr.bf16.mxu0 %v1312
    %1667 = vmatpush1.bf16.msra.mxu0 %v1311
    %1668 = vmatprep.subr.bf16.mxu0 %v1316
    %1669 = vmatpush1.bf16.msra.mxu0 %v1315
    %1670 = vmatprep.subr.bf16.mxu0 %v1320
    %1671 = vmatpush1.bf16.msra.mxu0 %v1319
    %1672 = vmatprep.subr.bf16.mxu0 %v1324
    %1673 = vmatpush1.bf16.msra.mxu0 %v1323
    %1674 = vmatprep.subr.bf16.mxu0 %v1328
    %1675 = vmatpush1.bf16.msra.mxu0 %v1327
    %1676 = vmatprep.subr.bf16.mxu0 %v1332
    %1677 = vmatpush1.bf16.msra.mxu0 %v1331
    %1678 = vmatprep.mubr.bf16.mxu0 %v133
    %1679 = vmatmul.mubr.bf16.gmra.mrb[0].mxu0 %v132
    %v1680 = vpop.f32.mrb[0].mxu0
    %v1681 = vadd.f32 %v1638, %v1680
    %v1682 = vpop.f32.mrb[0].mxu0
    %v1683 = vadd.f32 %v1640, %v1682
    %v1684 = vpop.f32.mrb[0].mxu0
    %v1685 = vadd.f32 %v1642, %v1684
    %v1686 = vpop.f32.mrb[0].mxu0
    %v1687 = vadd.f32 %v1644, %v1686
    %1688 = vdwg.mxu0
    %1689 = vmatprep.subr.bf16.mxu0 %v1336
    %1690 = vmatpush1.bf16.msra.mxu0 %v1335
    %1691 = vmatprep.subr.bf16.mxu0 %v1340
    %1692 = vmatpush1.bf16.msra.mxu0 %v1339
    %1693 = vmatprep.subr.bf16.mxu0 %v1344
    %1694 = vmatpush1.bf16.msra.mxu0 %v1343
    %1695 = vmatprep.subr.bf16.mxu0 %v1348
    %1696 = vmatpush1.bf16.msra.mxu0 %v1347
    %1697 = vmatprep.subr.bf16.mxu0 %v1352
    %1698 = vmatpush1.bf16.msra.mxu0 %v1351
    %1699 = vmatprep.subr.bf16.mxu0 %v1356
    %1700 = vmatpush1.bf16.msra.mxu0 %v1355
    %1701 = vmatprep.subr.bf16.mxu0 %v1360
    %1702 = vmatpush1.bf16.msra.mxu0 %v1359
    %1703 = vmatprep.subr.bf16.mxu0 %v1364
    %1704 = vmatpush1.bf16.msra.mxu0 %v1363
    %1705 = vmatprep.subr.bf16.mxu0 %v1368
    %1706 = vmatpush1.bf16.msra.mxu0 %v1367
    %1707 = vmatprep.subr.bf16.mxu0 %v1372
    %1708 = vmatpush1.bf16.msra.mxu0 %v1371
    %1709 = vmatprep.subr.bf16.mxu0 %v1376
    %1710 = vmatpush1.bf16.msra.mxu0 %v1375
    %1711 = vmatprep.subr.bf16.mxu0 %v1380
    %1712 = vmatpush1.bf16.msra.mxu0 %v1379
    %1713 = vmatprep.subr.bf16.mxu0 %v1384
    %1714 = vmatpush1.bf16.msra.mxu0 %v1383
    %1715 = vmatprep.subr.bf16.mxu0 %v1388
    %1716 = vmatpush1.bf16.msra.mxu0 %v1387
    %1717 = vmatprep.subr.bf16.mxu0 %v1392
    %1718 = vmatpush1.bf16.msra.mxu0 %v1391
    %1719 = vmatprep.subr.bf16.mxu0 %v1396
    %1720 = vmatpush1.bf16.msra.mxu0 %v1395
    %1721 = vmatprep.mubr.bf16.mxu0 %v135
    %1722 = vmatmul.mubr.bf16.gmra.mrb[0].mxu0 %v134
    %v1723 = vpop.f32.mrb[0].mxu0
    %v1724 = vadd.f32 %v1681, %v1723
    %v1725 = vpop.f32.mrb[0].mxu0
    %v1726 = vadd.f32 %v1683, %v1725
    %v1727 = vpop.f32.mrb[0].mxu0
    %v1728 = vadd.f32 %v1685, %v1727
    %v1729 = vpop.f32.mrb[0].mxu0
    %v1730 = vadd.f32 %v1687, %v1729
    %1731 = vdwg.mxu0
    %1732 = vmatprep.subr.bf16.mxu0 %v1400
    %1733 = vmatpush1.bf16.msra.mxu0 %v1399
    %1734 = vmatprep.subr.bf16.mxu0 0
    %1735 = vmatpush1.bf16.msra.mxu0 0
    %1736 = vmatprep.subr.bf16.mxu0 0
    %1737 = vmatpush1.bf16.msra.mxu0 0
    %1738 = vmatprep.subr.bf16.mxu0 0
    %1739 = vmatpush1.bf16.msra.mxu0 0
    %1740 = vmatprep.subr.bf16.mxu0 0
    %1741 = vmatpush1.bf16.msra.mxu0 0
    %1742 = vmatprep.subr.bf16.mxu0 0
    %1743 = vmatpush1.bf16.msra.mxu0 0
    %1744 = vmatprep.subr.bf16.mxu0 0
    %1745 = vmatpush1.bf16.msra.mxu0 0
    %1746 = vmatprep.subr.bf16.mxu0 0
    %1747 = vmatpush1.bf16.msra.mxu0 0
    %1748 = vmatprep.subr.bf16.mxu0 0
    %1749 = vmatpush1.bf16.msra.mxu0 0
    %1750 = vmatprep.subr.bf16.mxu0 0
    %1751 = vmatpush1.bf16.msra.mxu0 0
    %1752 = vmatprep.subr.bf16.mxu0 0
    %1753 = vmatpush1.bf16.msra.mxu0 0
    %1754 = vmatprep.subr.bf16.mxu0 0
    %1755 = vmatpush1.bf16.msra.mxu0 0
    %1756 = vmatprep.subr.bf16.mxu0 0
    %1757 = vmatpush1.bf16.msra.mxu0 0
    %1758 = vmatprep.subr.bf16.mxu0 0
    %1759 = vmatpush1.bf16.msra.mxu0 0
    %1760 = vmatprep.subr.bf16.mxu0 0
    %1761 = vmatpush1.bf16.msra.mxu0 0
    %1762 = vmatprep.subr.bf16.mxu0 0
    %1763 = vmatpush1.bf16.msra.mxu0 0
    %1764 = vmatprep.mubr.bf16.mxu0 0
    %1765 = vmatmul.mubr.bf16.gmra.mrb[0].mxu0 %v1601
    %v1766 = vpop.f32.mrb[0].mxu0
    %v1767 = vadd.f32 %v1724, %v1766
    %v1768 = vpop.f32.mrb[0].mxu0
    %v1769 = vadd.f32 %v1726, %v1768
    %v1770 = vpop.f32.mrb[0].mxu0
    %v1771 = vadd.f32 %v1728, %v1770
    %v1772 = vpop.f32.mrb[0].mxu0
    %v1773 = vadd.f32 %v1730, %v1772
    %1774 = vdwg.mxu0
    %1775 = vmatprep.subr.bf16.mxu0 %v1210
    %1776 = vmatpush1.bf16.msra.mxu0 %v1209
    %1777 = vmatprep.subr.bf16.mxu0 %v1214
    %1778 = vmatpush1.bf16.msra.mxu0 %v1213
    %1779 = vmatprep.subr.bf16.mxu0 %v1218
    %1780 = vmatpush1.bf16.msra.mxu0 %v1217
    %1781 = vmatprep.subr.bf16.mxu0 %v1222
    %1782 = vmatpush1.bf16.msra.mxu0 %v1221
    %1783 = vmatprep.subr.bf16.mxu0 %v1226
    %1784 = vmatpush1.bf16.msra.mxu0 %v1225
    %1785 = vmatprep.subr.bf16.mxu0 %v1230
    %1786 = vmatpush1.bf16.msra.mxu0 %v1229
    %1787 = vmatprep.subr.bf16.mxu0 %v1234
    %1788 = vmatpush1.bf16.msra.mxu0 %v1233
    %1789 = vmatprep.subr.bf16.mxu0 %v1238
    %1790 = vmatpush1.bf16.msra.mxu0 %v1237
    %1791 = vmatprep.subr.bf16.mxu0 %v1242
    %1792 = vmatpush1.bf16.msra.mxu0 %v1241
    %1793 = vmatprep.subr.bf16.mxu0 %v1246
    %1794 = vmatpush1.bf16.msra.mxu0 %v1245
    %1795 = vmatprep.subr.bf16.mxu0 %v1250
    %1796 = vmatpush1.bf16.msra.mxu0 %v1249
    %1797 = vmatprep.subr.bf16.mxu0 %v1254
    %1798 = vmatpush1.bf16.msra.mxu0 %v1253
    %1799 = vmatprep.subr.bf16.mxu0 %v1258
    %1800 = vmatpush1.bf16.msra.mxu0 %v1257
    %1801 = vmatprep.subr.bf16.mxu0 %v1262
    %1802 = vmatpush1.bf16.msra.mxu0 %v1261
    %1803 = vmatprep.subr.bf16.mxu0 %v1266
    %1804 = vmatpush1.bf16.msra.mxu0 %v1265
    %1805 = vmatprep.subr.bf16.mxu0 %v1270
    %1806 = vmatpush1.bf16.msra.mxu0 %v1269
    %1807 = vmatprep.mubr.bf16.mxu0 %v131
    %1808 = vmatmul.mubr.bf16.gmra.mrb[0].mxu0 %v130
    %v1809 = vpop.f32.mrb[0].mxu0
    %v1810 = vadd.f32 %v611, %v1809
    %v1811 = vpop.f32.mrb[0].mxu0
    %v1812 = vadd.f32 %v613, %v1811
    %v1813 = vpop.f32.mrb[0].mxu0
    %v1814 = vadd.f32 %v615, %v1813
    %v1815 = vpop.f32.mrb[0].mxu0
    %v1816 = vadd.f32 %v617, %v1815
    %1817 = vdwg.mxu0
    %1818 = vmatprep.subr.bf16.mxu0 %v1274
    %1819 = vmatpush1.bf16.msra.mxu0 %v1273
    %1820 = vmatprep.subr.bf16.mxu0 %v1278
    %1821 = vmatpush1.bf16.msra.mxu0 %v1277
    %1822 = vmatprep.subr.bf16.mxu0 %v1282
    %1823 = vmatpush1.bf16.msra.mxu0 %v1281
    %1824 = vmatprep.subr.bf16.mxu0 %v1286
    %1825 = vmatpush1.bf16.msra.mxu0 %v1285
    %1826 = vmatprep.subr.bf16.mxu0 %v1290
    %1827 = vmatpush1.bf16.msra.mxu0 %v1289
    %1828 = vmatprep.subr.bf16.mxu0 %v1294
    %1829 = vmatpush1.bf16.msra.mxu0 %v1293
    %1830 = vmatprep.subr.bf16.mxu0 %v1298
    %1831 = vmatpush1.bf16.msra.mxu0 %v1297
    %1832 = vmatprep.subr.bf16.mxu0 %v1302
    %1833 = vmatpush1.bf16.msra.mxu0 %v1301
    %1834 = vmatprep.subr.bf16.mxu0 %v1306
    %1835 = vmatpush1.bf16.msra.mxu0 %v1305
    %1836 = vmatprep.subr.bf16.mxu0 %v1310
    %1837 = vmatpush1.bf16.msra.mxu0 %v1309
    %1838 = vmatprep.subr.bf16.mxu0 %v1314
    %1839 = vmatpush1.bf16.msra.mxu0 %v1313
    %1840 = vmatprep.subr.bf16.mxu0 %v1318
    %1841 = vmatpush1.bf16.msra.mxu0 %v1317
    %1842 = vmatprep.subr.bf16.mxu0 %v1322
    %1843 = vmatpush1.bf16.msra.mxu0 %v1321
    %1844 = vmatprep.subr.bf16.mxu0 %v1326
    %1845 = vmatpush1.bf16.msra.mxu0 %v1325
    %1846 = vmatprep.subr.bf16.mxu0 %v1330
    %1847 = vmatpush1.bf16.msra.mxu0 %v1329
    %1848 = vmatprep.subr.bf16.mxu0 %v1334
    %1849 = vmatpush1.bf16.msra.mxu0 %v1333
    %1850 = vmatprep.mubr.bf16.mxu0 %v133
    %1851 = vmatmul.mubr.bf16.gmra.mrb[0].mxu0 %v132
    %v1852 = vpop.f32.mrb[0].mxu0
    %v1853 = vadd.f32 %v1810, %v1852
    %v1854 = vpop.f32.mrb[0].mxu0
    %v1855 = vadd.f32 %v1812, %v1854
    %v1856 = vpop.f32.mrb[0].mxu0
    %v1857 = vadd.f32 %v1814, %v1856
    %v1858 = vpop.f32.mrb[0].mxu0
    %v1859 = vadd.f32 %v1816, %v1858
    %1860 = vdwg.mxu0
    %1861 = vmatprep.subr.bf16.mxu0 %v1338
    %1862 = vmatpush1.bf16.msra.mxu0 %v1337
    %1863 = vmatprep.subr.bf16.mxu0 %v1342
    %1864 = vmatpush1.bf16.msra.mxu0 %v1341
    %1865 = vmatprep.subr.bf16.mxu0 %v1346
    %1866 = vmatpush1.bf16.msra.mxu0 %v1345
    %1867 = vmatprep.subr.bf16.mxu0 %v1350
    %1868 = vmatpush1.bf16.msra.mxu0 %v1349
    %1869 = vmatprep.subr.bf16.mxu0 %v1354
    %1870 = vmatpush1.bf16.msra.mxu0 %v1353
    %1871 = vmatprep.subr.bf16.mxu0 %v1358
    %1872 = vmatpush1.bf16.msra.mxu0 %v1357
    %1873 = vmatprep.subr.bf16.mxu0 %v1362
    %1874 = vmatpush1.bf16.msra.mxu0 %v1361
    %1875 = vmatprep.subr.bf16.mxu0 %v1366
    %1876 = vmatpush1.bf16.msra.mxu0 %v1365
    %1877 = vmatprep.subr.bf16.mxu0 %v1370
    %1878 = vmatpush1.bf16.msra.mxu0 %v1369
    %1879 = vmatprep.subr.bf16.mxu0 %v1374
    %1880 = vmatpush1.bf16.msra.mxu0 %v1373
    %1881 = vmatprep.subr.bf16.mxu0 %v1378
    %1882 = vmatpush1.bf16.msra.mxu0 %v1377
    %1883 = vmatprep.subr.bf16.mxu0 %v1382
    %1884 = vmatpush1.bf16.msra.mxu0 %v1381
    %1885 = vmatprep.subr.bf16.mxu0 %v1386
    %1886 = vmatpush1.bf16.msra.mxu0 %v1385
    %1887 = vmatprep.subr.bf16.mxu0 %v1390
    %1888 = vmatpush1.bf16.msra.mxu0 %v1389
    %1889 = vmatprep.subr.bf16.mxu0 %v1394
    %1890 = vmatpush1.bf16.msra.mxu0 %v1393
    %1891 = vmatprep.subr.bf16.mxu0 %v1398
    %1892 = vmatpush1.bf16.msra.mxu0 %v1397
    %1893 = vmatprep.mubr.bf16.mxu0 %v135
    %1894 = vmatmul.mubr.bf16.gmra.mrb[0].mxu0 %v134
    %v1895 = vpop.f32.mrb[0].mxu0
    %v1896 = vadd.f32 %v1853, %v1895
    %v1897 = vpop.f32.mrb[0].mxu0
    %v1898 = vadd.f32 %v1855, %v1897
    %v1899 = vpop.f32.mrb[0].mxu0
    %v1900 = vadd.f32 %v1857, %v1899
    %v1901 = vpop.f32.mrb[0].mxu0
    %v1902 = vadd.f32 %v1859, %v1901
    %1903 = vdwg.mxu0
    %1904 = vmatprep.subr.bf16.mxu0 %v1402
    %1905 = vmatpush1.bf16.msra.mxu0 %v1401
    %1906 = vmatprep.subr.bf16.mxu0 0
    %1907 = vmatpush1.bf16.msra.mxu0 0
    %1908 = vmatprep.subr.bf16.mxu0 0
    %1909 = vmatpush1.bf16.msra.mxu0 0
    %1910 = vmatprep.subr.bf16.mxu0 0
    %1911 = vmatpush1.bf16.msra.mxu0 0
    %1912 = vmatprep.subr.bf16.mxu0 0
    %1913 = vmatpush1.bf16.msra.mxu0 0
    %1914 = vmatprep.subr.bf16.mxu0 0
    %1915 = vmatpush1.bf16.msra.mxu0 0
    %1916 = vmatprep.subr.bf16.mxu0 0
    %1917 = vmatpush1.bf16.msra.mxu0 0
    %1918 = vmatprep.subr.bf16.mxu0 0
    %1919 = vmatpush1.bf16.msra.mxu0 0
    %1920 = vmatprep.subr.bf16.mxu0 0
    %1921 = vmatpush1.bf16.msra.mxu0 0
    %1922 = vmatprep.subr.bf16.mxu0 0
    %1923 = vmatpush1.bf16.msra.mxu0 0
    %1924 = vmatprep.subr.bf16.mxu0 0
    %1925 = vmatpush1.bf16.msra.mxu0 0
    %1926 = vmatprep.subr.bf16.mxu0 0
    %1927 = vmatpush1.bf16.msra.mxu0 0
    %1928 = vmatprep.subr.bf16.mxu0 0
    %1929 = vmatpush1.bf16.msra.mxu0 0
    %1930 = vmatprep.subr.bf16.mxu0 0
    %1931 = vmatpush1.bf16.msra.mxu0 0
    %1932 = vmatprep.subr.bf16.mxu0 0
    %1933 = vmatpush1.bf16.msra.mxu0 0
    %1934 = vmatprep.subr.bf16.mxu0 0
    %1935 = vmatpush1.bf16.msra.mxu0 0
    %1936 = vmatprep.mubr.bf16.mxu0 0
    %1937 = vmatmul.mubr.bf16.gmra.mrb[0].mxu0 %v1601
    %v1938 = vpop.f32.mrb[0].mxu0
    %v1939 = vadd.f32 %v1896, %v1938
    %v1940 = vpop.f32.mrb[0].mxu0
    %v1941 = vadd.f32 %v1898, %v1940
    %v1942 = vpop.f32.mrb[0].mxu0
    %v1943 = vadd.f32 %v1900, %v1942
    %v1944 = vpop.f32.mrb[0].mxu0
    %v1945 = vadd.f32 %v1902, %v1944
    %1946 = vdwg.mxu0
    %v1947 = vld [vmem:[%s4] sm:$0xf]
    %v1949 = vlaneseq
    %v1950 = vshrl.u32 %v1949, 7
    %v1951 = vsub.s32 0, %v1950
    %v1952 = vrot.slane %v1947, %v1951
    %v1953 = vlaneseq
    %v1954 = vshrl.u32 %v1953, 7
    %v1955 = vsub.s32 1, %v1954
    %v1956 = vrot.slane %v1947, %v1955
    %v1957 = vlaneseq
    %v1958 = vshrl.u32 %v1957, 7
    %v1959 = vsub.s32 2, %v1958
    %v1960 = vrot.slane %v1947, %v1959
    %v1961 = vlaneseq
    %v1962 = vshrl.u32 %v1961, 7
    %v1963 = vsub.s32 3, %v1962
    %v1964 = vrot.slane %v1947, %v1963
    %v1969 = vadd.f32 %v1767, %v1952
    %v1970 = vadd.f32 %v1769, %v1956
    %v1971 = vadd.f32 %v1939, %v1960
    %v1972 = vadd.f32 %v1941, %v1964
    %v1973 = vadd.f32 %v1771, %v1952
    %v1974 = vadd.f32 %v1773, %v1956
    %v1975 = vadd.f32 %v1943, %v1960
    %v1976 = vadd.f32 %v1945, %v1964
    %vm1977 = vcmp.gt.f32.partialorder %v1969, 0.0
    %vm1978 = vcmp.gt.f32.partialorder %v1970, 0.0
    %vm1979 = vcmp.gt.f32.partialorder %v1971, 0.0
    %vm1980 = vcmp.gt.f32.partialorder %v1972, 0.0
    %vm1981 = vcmp.gt.f32.partialorder %v1973, 0.0
    %vm1982 = vcmp.gt.f32.partialorder %v1974, 0.0
    %vm1983 = vcmp.gt.f32.partialorder %v1975, 0.0
    %vm1984 = vcmp.gt.f32.partialorder %v1976, 0.0
    %v1985 = vmul.f32 %v1969, 0.2
    %v1986 = vmul.f32 %v1970, 0.2
    %v1987 = vmul.f32 %v1971, 0.2
    %v1988 = vmul.f32 %v1972, 0.2
    %v1989 = vmul.f32 %v1973, 0.2
    %v1990 = vmul.f32 %v1974, 0.2
    %v1991 = vmul.f32 %v1975, 0.2
    %v1992 = vmul.f32 %v1976, 0.2
    %v1993 = vsel %vm1977, %v1969, %v1985
    %v1994 = vsel %vm1978, %v1970, %v1986
    %v1995 = vsel %vm1979, %v1971, %v1987
    %v1996 = vsel %vm1980, %v1972, %v1988
    %v1997 = vsel %vm1981, %v1973, %v1989
    %v1998 = vsel %vm1982, %v1974, %v1990
    %v1999 = vsel %vm1983, %v1975, %v1991
    %v2000 = vsel %vm1984, %v1976, %v1992
    %v2001 = vpack.c.bf16 %v1997, %v1993
    %v2002 = vpack.c.bf16 %v1998, %v1994
    %v2003 = vpack.c.bf16 %v1999, %v1995
    %v2004 = vpack.c.bf16 %v2000, %v1996
    %v2005 = vld [vmem:[#allocation10] sm:$0xff]
    %v2006 = vld [vmem:[#allocation10 + $0x8] sm:$0xff]
    %v2007 = vld [vmem:[#allocation10 + $0x10] sm:$0xff]
    %v2008 = vld [vmem:[#allocation10 + $0x18] sm:$0xff]
    %v2009 = vld [vmem:[#allocation10 + $0x20] sm:$0xff]
    %v2010 = vld [vmem:[#allocation10 + $0x28] sm:$0xff]
    %v2011 = vld [vmem:[#allocation10 + $0x30] sm:$0xff]
    %v2012 = vld [vmem:[#allocation10 + $0x38] sm:$0xff]
    %v2013 = vld [vmem:[#allocation10 + $0x40] sm:$0xff]
    %v2014 = vld [vmem:[#allocation10 + $0x48] sm:$0xff]
    %v2015 = vld [vmem:[#allocation10 + $0x50] sm:$0xff]
    %v2016 = vld [vmem:[#allocation10 + $0x58] sm:$0xff]
    %v2017 = vld [vmem:[#allocation10 + $0x60] sm:$0xff]
    %v2018 = vld [vmem:[#allocation10 + $0x68] sm:$0xff]
    %v2019 = vld [vmem:[#allocation10 + $0x70] sm:$0xff]
    %v2020 = vld [vmem:[#allocation10 + $0x78] sm:$0xff]
    %v2021 = vld [vmem:[#allocation10 + $0x80] sm:$0xff]
    %v2022 = vld [vmem:[#allocation10 + $0x88] sm:$0xff]
    %v2023 = vld [vmem:[#allocation10 + $0x90] sm:$0xff]
    %v2024 = vld [vmem:[#allocation10 + $0x98] sm:$0xff]
    %v2025 = vld [vmem:[#allocation10 + $0xa0] sm:$0xff]
    %v2026 = vld [vmem:[#allocation10 + $0xa8] sm:$0xff]
    %v2027 = vld [vmem:[#allocation10 + $0xb0] sm:$0xff]
    %v2028 = vld [vmem:[#allocation10 + $0xb8] sm:$0xff]
    %v2029 = vld [vmem:[#allocation10 + $0xc0] sm:$0xff]
    %v2030 = vld [vmem:[#allocation10 + $0xc8] sm:$0xff]
    %v2031 = vld [vmem:[#allocation10 + $0xd0] sm:$0xff]
    %v2032 = vld [vmem:[#allocation10 + $0xd8] sm:$0xff]
    %v2033 = vld [vmem:[#allocation10 + $0xe0] sm:$0xff]
    %v2034 = vld [vmem:[#allocation10 + $0xe8] sm:$0xff]
    %v2035 = vld [vmem:[#allocation10 + $0xf0] sm:$0xff]
    %v2036 = vld [vmem:[#allocation10 + $0xf8] sm:$0xff]
    %v2037 = vld [vmem:[#allocation10 + $0x100] sm:$0xff]
    %v2038 = vld [vmem:[#allocation10 + $0x108] sm:$0xff]
    %v2039 = vld [vmem:[#allocation10 + $0x110] sm:$0xff]
    %v2040 = vld [vmem:[#allocation10 + $0x118] sm:$0xff]
    %v2041 = vld [vmem:[#allocation10 + $0x120] sm:$0xff]
    %v2042 = vld [vmem:[#allocation10 + $0x128] sm:$0xff]
    %v2043 = vld [vmem:[#allocation10 + $0x130] sm:$0xff]
    %v2044 = vld [vmem:[#allocation10 + $0x138] sm:$0xff]
    %v2045 = vld [vmem:[#allocation10 + $0x140] sm:$0xff]
    %v2046 = vld [vmem:[#allocation10 + $0x148] sm:$0xff]
    %v2047 = vld [vmem:[#allocation10 + $0x150] sm:$0xff]
    %v2048 = vld [vmem:[#allocation10 + $0x158] sm:$0xff]
    %v2049 = vld [vmem:[#allocation10 + $0x160] sm:$0xff]
    %v2050 = vld [vmem:[#allocation10 + $0x168] sm:$0xff]
    %v2051 = vld [vmem:[#allocation10 + $0x170] sm:$0xff]
    %v2052 = vld [vmem:[#allocation10 + $0x178] sm:$0xff]
    %v2053 = vld [vmem:[#allocation10 + $0x180] sm:$0xff]
    %v2054 = vld [vmem:[#allocation10 + $0x188] sm:$0xff]
    %v2055 = vld [vmem:[#allocation10 + $0x190] sm:$0xff]
    %v2056 = vld [vmem:[#allocation10 + $0x198] sm:$0xff]
    %v2057 = vld [vmem:[#allocation10 + $0x1a0] sm:$0xff]
    %v2058 = vld [vmem:[#allocation10 + $0x1a8] sm:$0xff]
    %v2059 = vld [vmem:[#allocation10 + $0x1b0] sm:$0xff]
    %v2060 = vld [vmem:[#allocation10 + $0x1b8] sm:$0xff]
    %v2061 = vld [vmem:[#allocation10 + $0x1c0] sm:$0xff]
    %v2062 = vld [vmem:[#allocation10 + $0x1c8] sm:$0xff]
    %v2063 = vld [vmem:[#allocation10 + $0x1d0] sm:$0xff]
    %v2064 = vld [vmem:[#allocation10 + $0x1d8] sm:$0xff]
    %v2065 = vld [vmem:[#allocation10 + $0x1e0] sm:$0xff]
    %v2066 = vld [vmem:[#allocation10 + $0x1e8] sm:$0xff]
    %v2067 = vld [vmem:[#allocation10 + $0x1f0] sm:$0xff]
    %v2068 = vld [vmem:[#allocation10 + $0x1f8] sm:$0xff]
    %v2069 = vld [vmem:[%s6] sm:$0x3]
    %v2071 = vlaneseq
    %v2072 = vshrl.u32 %v2071, 7
    %v2073 = vsub.s32 0, %v2072
    %v2074 = vrot.slane %v2069, %v2073
    %v2075 = vlaneseq
    %v2076 = vshrl.u32 %v2075, 7
    %v2077 = vsub.s32 1, %v2076
    %v2078 = vrot.slane %v2069, %v2077
    %v2145 = vunpack.c.l.b16 %v2005
    %v2146 = vunpack.c.h.b16 %v2005
    %v2147 = vunpack.c.l.b16 %v2006
    %v2148 = vunpack.c.h.b16 %v2006
    %v2149 = vunpack.c.l.b16 %v2007
    %v2150 = vunpack.c.h.b16 %v2007
    %v2151 = vunpack.c.l.b16 %v2008
    %v2152 = vunpack.c.h.b16 %v2008
    %v2153 = vunpack.c.l.b16 %v2009
    %v2154 = vunpack.c.h.b16 %v2009
    %v2155 = vunpack.c.l.b16 %v2010
    %v2156 = vunpack.c.h.b16 %v2010
    %v2157 = vunpack.c.l.b16 %v2011
    %v2158 = vunpack.c.h.b16 %v2011
    %v2159 = vunpack.c.l.b16 %v2012
    %v2160 = vunpack.c.h.b16 %v2012
    %v2161 = vunpack.c.l.b16 %v2013
    %v2162 = vunpack.c.h.b16 %v2013
    %v2163 = vunpack.c.l.b16 %v2014
    %v2164 = vunpack.c.h.b16 %v2014
    %v2165 = vunpack.c.l.b16 %v2015
    %v2166 = vunpack.c.h.b16 %v2015
    %v2167 = vunpack.c.l.b16 %v2016
    %v2168 = vunpack.c.h.b16 %v2016
    %v2169 = vunpack.c.l.b16 %v2017
    %v2170 = vunpack.c.h.b16 %v2017
    %v2171 = vunpack.c.l.b16 %v2018
    %v2172 = vunpack.c.h.b16 %v2018
    %v2173 = vunpack.c.l.b16 %v2019
    %v2174 = vunpack.c.h.b16 %v2019
    %v2175 = vunpack.c.l.b16 %v2020
    %v2176 = vunpack.c.h.b16 %v2020
    %v2177 = vunpack.c.l.b16 %v2021
    %v2178 = vunpack.c.h.b16 %v2021
    %v2179 = vunpack.c.l.b16 %v2022
    %v2180 = vunpack.c.h.b16 %v2022
    %v2181 = vunpack.c.l.b16 %v2023
    %v2182 = vunpack.c.h.b16 %v2023
    %v2183 = vunpack.c.l.b16 %v2024
    %v2184 = vunpack.c.h.b16 %v2024
    %v2185 = vunpack.c.l.b16 %v2025
    %v2186 = vunpack.c.h.b16 %v2025
    %v2187 = vunpack.c.l.b16 %v2026
    %v2188 = vunpack.c.h.b16 %v2026
    %v2189 = vunpack.c.l.b16 %v2027
    %v2190 = vunpack.c.h.b16 %v2027
    %v2191 = vunpack.c.l.b16 %v2028
    %v2192 = vunpack.c.h.b16 %v2028
    %v2193 = vunpack.c.l.b16 %v2029
    %v2194 = vunpack.c.h.b16 %v2029
    %v2195 = vunpack.c.l.b16 %v2030
    %v2196 = vunpack.c.h.b16 %v2030
    %v2197 = vunpack.c.l.b16 %v2031
    %v2198 = vunpack.c.h.b16 %v2031
    %v2199 = vunpack.c.l.b16 %v2032
    %v2200 = vunpack.c.h.b16 %v2032
    %v2201 = vunpack.c.l.b16 %v2033
    %v2202 = vunpack.c.h.b16 %v2033
    %v2203 = vunpack.c.l.b16 %v2034
    %v2204 = vunpack.c.h.b16 %v2034
    %v2205 = vunpack.c.l.b16 %v2035
    %v2206 = vunpack.c.h.b16 %v2035
    %v2207 = vunpack.c.l.b16 %v2036
    %v2208 = vunpack.c.h.b16 %v2036
    %v2209 = vunpack.c.l.b16 %v2037
    %v2210 = vunpack.c.h.b16 %v2037
    %v2211 = vunpack.c.l.b16 %v2038
    %v2212 = vunpack.c.h.b16 %v2038
    %v2213 = vunpack.c.l.b16 %v2039
    %v2214 = vunpack.c.h.b16 %v2039
    %v2215 = vunpack.c.l.b16 %v2040
    %v2216 = vunpack.c.h.b16 %v2040
    %v2217 = vunpack.c.l.b16 %v2041
    %v2218 = vunpack.c.h.b16 %v2041
    %v2219 = vunpack.c.l.b16 %v2042
    %v2220 = vunpack.c.h.b16 %v2042
    %v2221 = vunpack.c.l.b16 %v2043
    %v2222 = vunpack.c.h.b16 %v2043
    %v2223 = vunpack.c.l.b16 %v2044
    %v2224 = vunpack.c.h.b16 %v2044
    %v2225 = vunpack.c.l.b16 %v2045
    %v2226 = vunpack.c.h.b16 %v2045
    %v2227 = vunpack.c.l.b16 %v2046
    %v2228 = vunpack.c.h.b16 %v2046
    %v2229 = vunpack.c.l.b16 %v2047
    %v2230 = vunpack.c.h.b16 %v2047
    %v2231 = vunpack.c.l.b16 %v2048
    %v2232 = vunpack.c.h.b16 %v2048
    %v2233 = vunpack.c.l.b16 %v2049
    %v2234 = vunpack.c.h.b16 %v2049
    %v2235 = vunpack.c.l.b16 %v2050
    %v2236 = vunpack.c.h.b16 %v2050
    %v2237 = vunpack.c.l.b16 %v2051
    %v2238 = vunpack.c.h.b16 %v2051
    %v2239 = vunpack.c.l.b16 %v2052
    %v2240 = vunpack.c.h.b16 %v2052
    %v2241 = vunpack.c.l.b16 %v2053
    %v2242 = vunpack.c.h.b16 %v2053
    %v2243 = vunpack.c.l.b16 %v2054
    %v2244 = vunpack.c.h.b16 %v2054
    %v2245 = vunpack.c.l.b16 %v2055
    %v2246 = vunpack.c.h.b16 %v2055
    %v2247 = vunpack.c.l.b16 %v2056
    %v2248 = vunpack.c.h.b16 %v2056
    %v2249 = vunpack.c.l.b16 %v2057
    %v2250 = vunpack.c.h.b16 %v2057
    %v2251 = vunpack.c.l.b16 %v2058
    %v2252 = vunpack.c.h.b16 %v2058
    %v2253 = vunpack.c.l.b16 %v2059
    %v2254 = vunpack.c.h.b16 %v2059
    %v2255 = vunpack.c.l.b16 %v2060
    %v2256 = vunpack.c.h.b16 %v2060
    %v2257 = vunpack.c.l.b16 %v2061
    %v2258 = vunpack.c.h.b16 %v2061
    %v2259 = vunpack.c.l.b16 %v2062
    %v2260 = vunpack.c.h.b16 %v2062
    %v2261 = vunpack.c.l.b16 %v2063
    %v2262 = vunpack.c.h.b16 %v2063
    %v2263 = vunpack.c.l.b16 %v2064
    %v2264 = vunpack.c.h.b16 %v2064
    %v2265 = vunpack.c.l.b16 %v2065
    %v2266 = vunpack.c.h.b16 %v2065
    %v2267 = vunpack.c.l.b16 %v2066
    %v2268 = vunpack.c.h.b16 %v2066
    %v2269 = vunpack.c.l.b16 %v2067
    %v2270 = vunpack.c.h.b16 %v2067
    %v2271 = vunpack.c.l.b16 %v2068
    %v2272 = vunpack.c.h.b16 %v2068
    %v2273 = vpack.c.b16 %v2147, %v2145
    %v2274 = vpack.c.b16 %v2148, %v2146
    %v2275 = vpack.c.b16 %v2151, %v2149
    %v2276 = vpack.c.b16 %v2152, %v2150
    %v2277 = vpack.c.b16 %v2155, %v2153
    %v2278 = vpack.c.b16 %v2156, %v2154
    %v2279 = vpack.c.b16 %v2159, %v2157
    %v2280 = vpack.c.b16 %v2160, %v2158
    %v2281 = vpack.c.b16 %v2163, %v2161
    %v2282 = vpack.c.b16 %v2164, %v2162
    %v2283 = vpack.c.b16 %v2167, %v2165
    %v2284 = vpack.c.b16 %v2168, %v2166
    %v2285 = vpack.c.b16 %v2171, %v2169
    %v2286 = vpack.c.b16 %v2172, %v2170
    %v2287 = vpack.c.b16 %v2175, %v2173
    %v2288 = vpack.c.b16 %v2176, %v2174
    %v2289 = vpack.c.b16 %v2179, %v2177
    %v2290 = vpack.c.b16 %v2180, %v2178
    %v2291 = vpack.c.b16 %v2183, %v2181
    %v2292 = vpack.c.b16 %v2184, %v2182
    %v2293 = vpack.c.b16 %v2187, %v2185
    %v2294 = vpack.c.b16 %v2188, %v2186
    %v2295 = vpack.c.b16 %v2191, %v2189
    %v2296 = vpack.c.b16 %v2192, %v2190
    %v2297 = vpack.c.b16 %v2195, %v2193
    %v2298 = vpack.c.b16 %v2196, %v2194
    %v2299 = vpack.c.b16 %v2199, %v2197
    %v2300 = vpack.c.b16 %v2200, %v2198
    %v2301 = vpack.c.b16 %v2203, %v2201
    %v2302 = vpack.c.b16 %v2204, %v2202
    %v2303 = vpack.c.b16 %v2207, %v2205
    %v2304 = vpack.c.b16 %v2208, %v2206
    %v2305 = vpack.c.b16 %v2211, %v2209
    %v2306 = vpack.c.b16 %v2212, %v2210
    %v2307 = vpack.c.b16 %v2215, %v2213
    %v2308 = vpack.c.b16 %v2216, %v2214
    %v2309 = vpack.c.b16 %v2219, %v2217
    %v2310 = vpack.c.b16 %v2220, %v2218
    %v2311 = vpack.c.b16 %v2223, %v2221
    %v2312 = vpack.c.b16 %v2224, %v2222
    %v2313 = vpack.c.b16 %v2227, %v2225
    %v2314 = vpack.c.b16 %v2228, %v2226
    %v2315 = vpack.c.b16 %v2231, %v2229
    %v2316 = vpack.c.b16 %v2232, %v2230
    %v2317 = vpack.c.b16 %v2235, %v2233
    %v2318 = vpack.c.b16 %v2236, %v2234
    %v2319 = vpack.c.b16 %v2239, %v2237
    %v2320 = vpack.c.b16 %v2240, %v2238
    %v2321 = vpack.c.b16 %v2243, %v2241
    %v2322 = vpack.c.b16 %v2244, %v2242
    %v2323 = vpack.c.b16 %v2247, %v2245
    %v2324 = vpack.c.b16 %v2248, %v2246
    %v2325 = vpack.c.b16 %v2251, %v2249
    %v2326 = vpack.c.b16 %v2252, %v2250
    %v2327 = vpack.c.b16 %v2255, %v2253
    %v2328 = vpack.c.b16 %v2256, %v2254
    %v2329 = vpack.c.b16 %v2259, %v2257
    %v2330 = vpack.c.b16 %v2260, %v2258
    %v2331 = vpack.c.b16 %v2263, %v2261
    %v2332 = vpack.c.b16 %v2264, %v2262
    %v2333 = vpack.c.b16 %v2267, %v2265
    %v2334 = vpack.c.b16 %v2268, %v2266
    %v2335 = vpack.c.b16 %v2271, %v2269
    %v2336 = vpack.c.b16 %v2272, %v2270
    %2401 = vmatprep.subr.bf16.mxu0 %v2274
    %2402 = vmatpush1.bf16.msra.mxu0 %v2273
    %2403 = vmatprep.subr.bf16.mxu0 %v2276
    %2404 = vmatpush1.bf16.msra.mxu0 %v2275
    %2405 = vmatprep.subr.bf16.mxu0 %v2278
    %2406 = vmatpush1.bf16.msra.mxu0 %v2277
    %2407 = vmatprep.subr.bf16.mxu0 %v2280
    %2408 = vmatpush1.bf16.msra.mxu0 %v2279
    %2409 = vmatprep.subr.bf16.mxu0 %v2282
    %2410 = vmatpush1.bf16.msra.mxu0 %v2281
    %2411 = vmatprep.subr.bf16.mxu0 %v2284
    %2412 = vmatpush1.bf16.msra.mxu0 %v2283
    %2413 = vmatprep.subr.bf16.mxu0 %v2286
    %2414 = vmatpush1.bf16.msra.mxu0 %v2285
    %2415 = vmatprep.subr.bf16.mxu0 %v2288
    %2416 = vmatpush1.bf16.msra.mxu0 %v2287
    %2417 = vmatprep.subr.bf16.mxu0 %v2290
    %2418 = vmatpush1.bf16.msra.mxu0 %v2289
    %2419 = vmatprep.subr.bf16.mxu0 %v2292
    %2420 = vmatpush1.bf16.msra.mxu0 %v2291
    %2421 = vmatprep.subr.bf16.mxu0 %v2294
    %2422 = vmatpush1.bf16.msra.mxu0 %v2293
    %2423 = vmatprep.subr.bf16.mxu0 %v2296
    %2424 = vmatpush1.bf16.msra.mxu0 %v2295
    %2425 = vmatprep.subr.bf16.mxu0 %v2298
    %2426 = vmatpush1.bf16.msra.mxu0 %v2297
    %2427 = vmatprep.subr.bf16.mxu0 %v2300
    %2428 = vmatpush1.bf16.msra.mxu0 %v2299
    %2429 = vmatprep.subr.bf16.mxu0 %v2302
    %2430 = vmatpush1.bf16.msra.mxu0 %v2301
    %2431 = vmatprep.subr.bf16.mxu0 %v2304
    %2432 = vmatpush1.bf16.msra.mxu0 %v2303
    %2433 = vmatprep.mubr.bf16.mxu0 %v2002
    %2434 = vmatmul.mubr.bf16.gmra.mrb[0].mxu0 %v2001
    %v2435 = vpop.f32.mrb[0].mxu0
    %v2436 = vadd.f32 %v2074, %v2435
    %v2437 = vpop.f32.mrb[0].mxu0
    %v2438 = vadd.f32 %v2078, %v2437
    %v2439 = vpop.f32.mrb[0].mxu0
    %v2440 = vadd.f32 %v2074, %v2439
    %v2441 = vpop.f32.mrb[0].mxu0
    %v2442 = vadd.f32 %v2078, %v2441
    %2443 = vdwg.mxu0
    %2444 = vmatprep.subr.bf16.mxu0 %v2306
    %2445 = vmatpush1.bf16.msra.mxu0 %v2305
    %2446 = vmatprep.subr.bf16.mxu0 %v2308
    %2447 = vmatpush1.bf16.msra.mxu0 %v2307
    %2448 = vmatprep.subr.bf16.mxu0 %v2310
    %2449 = vmatpush1.bf16.msra.mxu0 %v2309
    %2450 = vmatprep.subr.bf16.mxu0 %v2312
    %2451 = vmatpush1.bf16.msra.mxu0 %v2311
    %2452 = vmatprep.subr.bf16.mxu0 %v2314
    %2453 = vmatpush1.bf16.msra.mxu0 %v2313
    %2454 = vmatprep.subr.bf16.mxu0 %v2316
    %2455 = vmatpush1.bf16.msra.mxu0 %v2315
    %2456 = vmatprep.subr.bf16.mxu0 %v2318
    %2457 = vmatpush1.bf16.msra.mxu0 %v2317
    %2458 = vmatprep.subr.bf16.mxu0 %v2320
    %2459 = vmatpush1.bf16.msra.mxu0 %v2319
    %2460 = vmatprep.subr.bf16.mxu0 %v2322
    %2461 = vmatpush1.bf16.msra.mxu0 %v2321
    %2462 = vmatprep.subr.bf16.mxu0 %v2324
    %2463 = vmatpush1.bf16.msra.mxu0 %v2323
    %2464 = vmatprep.subr.bf16.mxu0 %v2326
    %2465 = vmatpush1.bf16.msra.mxu0 %v2325
    %2466 = vmatprep.subr.bf16.mxu0 %v2328
    %2467 = vmatpush1.bf16.msra.mxu0 %v2327
    %2468 = vmatprep.subr.bf16.mxu0 %v2330
    %2469 = vmatpush1.bf16.msra.mxu0 %v2329
    %2470 = vmatprep.subr.bf16.mxu0 %v2332
    %2471 = vmatpush1.bf16.msra.mxu0 %v2331
    %2472 = vmatprep.subr.bf16.mxu0 %v2334
    %2473 = vmatpush1.bf16.msra.mxu0 %v2333
    %2474 = vmatprep.subr.bf16.mxu0 %v2336
    %2475 = vmatpush1.bf16.msra.mxu0 %v2335
    %2476 = vmatprep.mubr.bf16.mxu0 %v2004
    %2477 = vmatmul.mubr.bf16.gmra.mrb[0].mxu0 %v2003
    %v2478 = vpop.f32.mrb[0].mxu0
    %v2479 = vadd.f32 %v2436, %v2478
    %v2480 = vpop.f32.mrb[0].mxu0
    %v2481 = vadd.f32 %v2438, %v2480
    %v2482 = vpop.f32.mrb[0].mxu0
    %v2483 = vadd.f32 %v2440, %v2482
    %v2484 = vpop.f32.mrb[0].mxu0
    %v2485 = vadd.f32 %v2442, %v2484
    %2486 = vdwg.mxu0
    %vm2487 = vcmp.gt.f32.partialorder %v2479, 0.0
    %vm2488 = vcmp.gt.f32.partialorder %v2481, 0.0
    %vm2489 = vcmp.gt.f32.partialorder %v2483, 0.0
    %vm2490 = vcmp.gt.f32.partialorder %v2485, 0.0
    %v2491 = vmul.f32 %v2479, 0.2
    %v2492 = vmul.f32 %v2481, 0.2
    %v2493 = vmul.f32 %v2483, 0.2
    %v2494 = vmul.f32 %v2485, 0.2
    %v2495 = vsel %vm2487, %v2479, %v2491
    %v2496 = vsel %vm2488, %v2481, %v2492
    %v2497 = vsel %vm2489, %v2483, %v2493
    %v2498 = vsel %vm2490, %v2485, %v2494
    %v2499 = vpack.c.bf16 %v2497, %v2495
    %v2500 = vpack.c.bf16 %v2498, %v2496
    %v2501 = vld [vmem:[#allocation11] sm:$0xf]
    %v2502 = vld [vmem:[#allocation11 + $0x4] sm:$0xf]
    %v2503 = vld [vmem:[#allocation11 + $0x8] sm:$0xf]
    %v2504 = vld [vmem:[#allocation11 + $0xc] sm:$0xf]
    %v2505 = vld [vmem:[#allocation11 + $0x10] sm:$0xf]
    %v2506 = vld [vmem:[#allocation11 + $0x14] sm:$0xf]
    %v2507 = vld [vmem:[#allocation11 + $0x18] sm:$0xf]
    %v2508 = vld [vmem:[#allocation11 + $0x1c] sm:$0xf]
    %v2509 = vld [vmem:[#allocation11 + $0x20] sm:$0xf]
    %v2510 = vld [vmem:[#allocation11 + $0x24] sm:$0xf]
    %v2511 = vld [vmem:[#allocation11 + $0x28] sm:$0xf]
    %v2512 = vld [vmem:[#allocation11 + $0x2c] sm:$0xf]
    %v2513 = vld [vmem:[#allocation11 + $0x30] sm:$0xf]
    %v2514 = vld [vmem:[#allocation11 + $0x34] sm:$0xf]
    %v2515 = vld [vmem:[#allocation11 + $0x38] sm:$0xf]
    %v2516 = vld [vmem:[#allocation11 + $0x3c] sm:$0xf]
    %v2517 = vld [vmem:[#allocation11 + $0x40] sm:$0xf]
    %v2518 = vld [vmem:[#allocation11 + $0x44] sm:$0xf]
    %v2519 = vld [vmem:[#allocation11 + $0x48] sm:$0xf]
    %v2520 = vld [vmem:[#allocation11 + $0x4c] sm:$0xf]
    %v2521 = vld [vmem:[#allocation11 + $0x50] sm:$0xf]
    %v2522 = vld [vmem:[#allocation11 + $0x54] sm:$0xf]
    %v2523 = vld [vmem:[#allocation11 + $0x58] sm:$0xf]
    %v2524 = vld [vmem:[#allocation11 + $0x5c] sm:$0xf]
    %v2525 = vld [vmem:[#allocation11 + $0x60] sm:$0xf]
    %v2526 = vld [vmem:[#allocation11 + $0x64] sm:$0xf]
    %v2527 = vld [vmem:[#allocation11 + $0x68] sm:$0xf]
    %v2528 = vld [vmem:[#allocation11 + $0x6c] sm:$0xf]
    %v2529 = vld [vmem:[#allocation11 + $0x70] sm:$0xf]
    %v2530 = vld [vmem:[#allocation11 + $0x74] sm:$0xf]
    %v2531 = vld [vmem:[#allocation11 + $0x78] sm:$0xf]
    %v2532 = vld [vmem:[#allocation11 + $0x7c] sm:$0xf]
    %v2533 = vld [vmem:[%s8] sm:$0x1]
    %v2535 = vlaneseq
    %v2536 = vshrl.u32 %v2535, 7
    %v2537 = vsub.s32 0, %v2536
    %v2538 = vrot.slane %v2533, %v2537
    %v2572 = vunpack.c.l.b16 %v2501
    %v2573 = vunpack.c.l.b16 %v2502
    %v2574 = vunpack.c.l.b16 %v2503
    %v2575 = vunpack.c.l.b16 %v2504
    %v2576 = vunpack.c.l.b16 %v2505
    %v2577 = vunpack.c.l.b16 %v2506
    %v2578 = vunpack.c.l.b16 %v2507
    %v2579 = vunpack.c.l.b16 %v2508
    %v2580 = vunpack.c.l.b16 %v2509
    %v2581 = vunpack.c.l.b16 %v2510
    %v2582 = vunpack.c.l.b16 %v2511
    %v2583 = vunpack.c.l.b16 %v2512
    %v2584 = vunpack.c.l.b16 %v2513
    %v2585 = vunpack.c.l.b16 %v2514
    %v2586 = vunpack.c.l.b16 %v2515
    %v2587 = vunpack.c.l.b16 %v2516
    %v2588 = vunpack.c.l.b16 %v2517
    %v2589 = vunpack.c.l.b16 %v2518
    %v2590 = vunpack.c.l.b16 %v2519
    %v2591 = vunpack.c.l.b16 %v2520
    %v2592 = vunpack.c.l.b16 %v2521
    %v2593 = vunpack.c.l.b16 %v2522
    %v2594 = vunpack.c.l.b16 %v2523
    %v2595 = vunpack.c.l.b16 %v2524
    %v2596 = vunpack.c.l.b16 %v2525
    %v2597 = vunpack.c.l.b16 %v2526
    %v2598 = vunpack.c.l.b16 %v2527
    %v2599 = vunpack.c.l.b16 %v2528
    %v2600 = vunpack.c.l.b16 %v2529
    %v2601 = vunpack.c.l.b16 %v2530
    %v2602 = vunpack.c.l.b16 %v2531
    %v2603 = vunpack.c.l.b16 %v2532
    %v2604 = vpack.c.b16 %v2573, %v2572
    %v2605 = vpack.c.b16 %v2575, %v2574
    %v2606 = vpack.c.b16 %v2577, %v2576
    %v2607 = vpack.c.b16 %v2579, %v2578
    %v2608 = vpack.c.b16 %v2581, %v2580
    %v2609 = vpack.c.b16 %v2583, %v2582
    %v2610 = vpack.c.b16 %v2585, %v2584
    %v2611 = vpack.c.b16 %v2587, %v2586
    %v2612 = vpack.c.b16 %v2589, %v2588
    %v2613 = vpack.c.b16 %v2591, %v2590
    %v2614 = vpack.c.b16 %v2593, %v2592
    %v2615 = vpack.c.b16 %v2595, %v2594
    %v2616 = vpack.c.b16 %v2597, %v2596
    %v2617 = vpack.c.b16 %v2599, %v2598
    %v2618 = vpack.c.b16 %v2601, %v2600
    %v2619 = vpack.c.b16 %v2603, %v2602
    %2636 = vmatprep.subr.bf16.mxu0 0
    %2637 = vmatpush1.bf16.msra.mxu0 %v2604
    %2638 = vmatprep.subr.bf16.mxu0 0
    %2639 = vmatpush1.bf16.msra.mxu0 %v2605
    %2640 = vmatprep.subr.bf16.mxu0 0
    %2641 = vmatpush1.bf16.msra.mxu0 %v2606
    %2642 = vmatprep.subr.bf16.mxu0 0
    %2643 = vmatpush1.bf16.msra.mxu0 %v2607
    %2644 = vmatprep.subr.bf16.mxu0 0
    %2645 = vmatpush1.bf16.msra.mxu0 %v2608
    %2646 = vmatprep.subr.bf16.mxu0 0
    %2647 = vmatpush1.bf16.msra.mxu0 %v2609
    %2648 = vmatprep.subr.bf16.mxu0 0
    %2649 = vmatpush1.bf16.msra.mxu0 %v2610
    %2650 = vmatprep.subr.bf16.mxu0 0
    %2651 = vmatpush1.bf16.msra.mxu0 %v2611
    %2652 = vmatprep.subr.bf16.mxu0 0
    %2653 = vmatpush1.bf16.msra.mxu0 %v2612
    %2654 = vmatprep.subr.bf16.mxu0 0
    %2655 = vmatpush1.bf16.msra.mxu0 %v2613
    %2656 = vmatprep.subr.bf16.mxu0 0
    %2657 = vmatpush1.bf16.msra.mxu0 %v2614
    %2658 = vmatprep.subr.bf16.mxu0 0
    %2659 = vmatpush1.bf16.msra.mxu0 %v2615
    %2660 = vmatprep.subr.bf16.mxu0 0
    %2661 = vmatpush1.bf16.msra.mxu0 %v2616
    %2662 = vmatprep.subr.bf16.mxu0 0
    %2663 = vmatpush1.bf16.msra.mxu0 %v2617
    %2664 = vmatprep.subr.bf16.mxu0 0
    %2665 = vmatpush1.bf16.msra.mxu0 %v2618
    %2666 = vmatprep.subr.bf16.mxu0 0
    %2667 = vmatpush1.bf16.msra.mxu0 %v2619
    %2668 = vmatprep.mubr.bf16.mxu0 %v2500
    %2669 = vmatmul.mubr.bf16.gmra.mrb[0].mxu0 %v2499
    %v2670 = vpop.f32.mrb[0].mxu0
    %v2671 = vadd.f32 %v2538, %v2670
    %v2672 = vpop.f32.mrb[0].mxu0
    %v2673 = vpop.f32.mrb[0].mxu0
    %v2674 = vadd.f32 %v2538, %v2673
    %v2675 = vpop.f32.mrb[0].mxu0
    %2676 = vdwg.mxu0
    %v2677 = vand.u32 2147483647, %v2671
    %v2678 = vand.u32 2147483647, %v2674
    %v2679 = vsub.f32 0.0, %v2677
    %v2680 = vsub.f32 0.0, %v2678
    %v2681 = vmul.f32 %v2679, 1.442695
    %v2682 = vpow.pop %v2681
    %v2683 = vmul.f32 %v2680, 1.442695
    %v2684 = vpow.pop %v2683
    %v2685 = vadd.f32 %v2682, 1.0
    %v2686 = vadd.f32 %v2684, 1.0
    %v2687 = vrcp.pop %v2685
    %v2688 = vrcp.pop %v2686
    %vm2689 = vcmp.ge.f32.partialorder %v2671, 0.0
    %vm2690 = vcmp.ge.f32.partialorder %v2674, 0.0
    %v2691 = vmul.f32 %v2682, %v2687
    %v2692 = vmul.f32 %v2684, %v2688
    %v2693 = vsel %vm2689, %v2687, %v2691
    %v2694 = vsel %vm2690, %v2688, %v2692
    %2695 = vst [vmem:[#allocation13] sm:$0xff] %v2693
    %2696 = vst [vmem:[#allocation13 + $0x8] sm:$0xff] %v2694
    // Predicated region
    $region62: #{tpu_custom_call.1} parent=1 // pred_check
      _
    $region63: #{tpu_custom_call.1} parent=1 // pred_check_branch
      %2698 = sbr.rel (0) target = $region65
    $region64: #{tpu_custom_call.1} parent=1 // pred_region
      %s2700 = ssub.s32 256, 256
      %2701 = vsyncadd [#allocation4], %s2700
      %s2702 = sshll.u32 [#allocation13], 4
      %s2703 = int_to_ptr.vmem [resolvable:$true] %s2702
      %2708 = dma.vmem_to_hbm [thread:$0]  %s2703, 256, %s9, [#allocation4], 128, 128, 8
    $region65: #{tpu_custom_call.1} parent=1 // pred_fallthru
      _
    // Predicated region
    $region66: #{tpu_custom_call.1} parent=1 // pred_check
      _
    $region67: #{tpu_custom_call.1} parent=1 // pred_check_branch
      %2710 = sbr.rel (0) target = $region69
    $region68: #{tpu_custom_call.1} parent=1 // pred_region
      %2711 = dma.done [#allocation4], 256
    $region69: #{tpu_custom_call.1} parent=1 // pred_fallthru
      _
    %2712 = vsyncpa [#allocation3], 1
    %2713 = vsyncpa [#allocation6], 1
    %2714 = vsyncpa [#allocation9], 1
    %2715 = vsyncpa [#allocation12], 1
    %2716 = vsyncpa [#allocation4], 1

</llo_original>
